<compile_context>
chip_gen: v5e
topology: v5e:2x2
jax: 0.10.0
libtpu: 0.0.40
codegen_flags: <defaults>
</compile_context>

<pallas_src>
import math

import jax
import jax.numpy as jnp
from jax.experimental import pallas as pl
from jax.experimental.pallas import tpu as pltpu

# ---------------- tiny-BERT config ----------------
VOCAB = 100
HIDDEN = 32
NUM_HEADS = 2
HEAD_DIM = HIDDEN // NUM_HEADS
INTERMEDIATE = 64
NUM_LAYERS = 2
MAX_POS = 32
NUM_LABELS = 2
LN_EPS = 1e-12


# ---------------- in-kernel helpers ----------------
def _layernorm(x, g, b):
    mu = jnp.mean(x, axis=-1, keepdims=True)
    xc = x - mu
    var = jnp.mean(xc * xc, axis=-1, keepdims=True)
    return xc * jax.lax.rsqrt(var + LN_EPS) * g + b


def _gelu(x):
    # TODO(synk): HF BERT uses erf-GELU; tanh approximation matches the reference here.
    c = math.sqrt(2.0 / math.pi)
    return 0.5 * x * (1.0 + jnp.tanh(c * (x + 0.044715 * x * x * x)))


# ---------------- fused forward kernel ----------------
def _bert_fwd_kernel(
        x_ref, addmask_ref, labels_ref, eg_ref, eb_ref,
        qw_ref, qb_ref, kw_ref, kb_ref, vw_ref, vb_ref,
        aow_ref, aob_ref, ln1g_ref, ln1b_ref,
        iw_ref, ib_ref, ow_ref, ob_ref, ln2g_ref, ln2b_ref,
        pw_ref, pb_ref, cw_ref, cb_ref,
        loss_ref):
    f32 = jnp.float32
    BS = x_ref.shape[0]          # B * S
    B = labels_ref.shape[0]
    S = BS // B
    L = qw_ref.shape[0]
    C = cw_ref.shape[1]

    # ---- hoisted constants (built once per kernel invocation) ----
    addmask = addmask_ref[...]                                    # (BS, BS) additive

    lane_id = jax.lax.broadcasted_iota(jnp.int32, (1, HIDDEN), 1)
    head_masks = [
        jnp.logical_and(lane_id >= h * HEAD_DIM,
                        lane_id < (h + 1) * HEAD_DIM).astype(f32)
        for h in range(NUM_HEADS)
    ]

    sel_row = jax.lax.broadcasted_iota(jnp.int32, (B, BS), 0)
    sel_col = jax.lax.broadcasted_iota(jnp.int32, (B, BS), 1)
    cls_sel = (sel_col == sel_row * S).astype(f32)                # (B, BS) CLS picker

    # ---- embedding layernorm ----
    x = _layernorm(x_ref[...], eg_ref[...], eb_ref[...])          # (BS, H)

    # ---- encoder layers ----
    for l in range(L):
        # Q is pre-scaled by 1/sqrt(HEAD_DIM) in preprocess_params.
        q = jnp.dot(x, qw_ref[l], preferred_element_type=f32) + qb_ref[l]
        k = jnp.dot(x, kw_ref[l], preferred_element_type=f32) + kb_ref[l]
        v = jnp.dot(x, vw_ref[l], preferred_element_type=f32) + vb_ref[l]

        ctx = None
        for h in range(NUM_HEADS):
            # Lane-masked K/V instead of sub-128 lane slices; masked-out
            # columns contribute exactly 0 to the contraction, so per-head
            # scores / context are exact.
            kh = k * head_masks[h]
            vh = v * head_masks[h]
            s = jax.lax.dot_general(
                q, kh, (((1,), (1,)), ((), ())),
                preferred_element_type=f32) + addmask             # (BS, BS)
            mx = jnp.max(s, axis=-1, keepdims=True)
            p = jnp.exp(s - mx)
            p = p * pl.reciprocal(jnp.sum(p, axis=-1, keepdims=True),
                                  approx=True)
            ch = jnp.dot(p, vh, preferred_element_type=f32)       # (BS, H)
            ctx = ch if ctx is None else ctx + ch

        attn = jnp.dot(ctx, aow_ref[l], preferred_element_type=f32) + aob_ref[l]
        x = _layernorm(attn + x, ln1g_ref[l], ln1b_ref[l])

        inter = _gelu(jnp.dot(x, iw_ref[l], preferred_element_type=f32)
                      + ib_ref[l])
        out = jnp.dot(inter, ow_ref[l], preferred_element_type=f32) + ob_ref[l]
        x = _layernorm(out + x, ln2g_ref[l], ln2b_ref[l])

    # ---- CLS gather (constant selection matmul), pooler, classifier ----
    cls = jnp.dot(cls_sel, x, preferred_element_type=f32)         # (B, H)
    pooled = jnp.tanh(jnp.dot(cls, pw_ref[...],
                              preferred_element_type=f32) + pb_ref[...])
    logits = jnp.dot(pooled, cw_ref[...],
                     preferred_element_type=f32) + cb_ref[...]    # (B, C)

    # ---- vectorized softmax cross-entropy over CLS logits ----
    lab = labels_ref[...]                                         # (B, 1) int32
    onehot = (jax.lax.broadcasted_iota(jnp.int32, (B, C), 1) == lab).astype(f32)
    mx = jnp.max(logits, axis=-1, keepdims=True)
    lse = jnp.log(jnp.sum(jnp.exp(logits - mx), axis=-1, keepdims=True)) + mx
    tgt = jnp.sum(logits * onehot, axis=-1, keepdims=True)
    loss_ref[...] = jnp.sum(lse - tgt, keepdims=True) * (1.0 / B)


def _vmem_spec(shape):
    nd = len(shape)
    return pl.BlockSpec(shape, lambda *_: (0,) * nd)


# ---------------- one-time parameter preprocessing ----------------
def preprocess_params(params):
    """Stack per-layer weights, fold the 1/sqrt(head_dim) scale into Q, and
    reshape biases once, outside the per-call forward path."""
    scale = 1.0 / math.sqrt(HEAD_DIM)
    layers = params["layers"]

    def stack_w(key):
        return jnp.stack([lp[key] for lp in layers], axis=0)        # (L, a, b)

    def stack_b(key):
        return jnp.stack([lp[key] for lp in layers], axis=0)[:, None, :]  # (L,1,d)

    return {
        "word_emb": params["word_emb"],
        "pos_emb": params["pos_emb"],
        "type_emb": params["type_emb"],
        "emb_ln_g": params["emb_ln_g"].reshape(1, HIDDEN),
        "emb_ln_b": params["emb_ln_b"].reshape(1, HIDDEN),
        "qw": stack_w("q_w") * scale, "qb": stack_b("q_b") * scale,
        "kw": stack_w("k_w"), "kb": stack_b("k_b"),
        "vw": stack_w("v_w"), "vb": stack_b("v_b"),
        "aow": stack_w("ao_w"), "aob": stack_b("ao_b"),
        "ln1g": stack_b("ln1_g"), "ln1b": stack_b("ln1_b"),
        "iw": stack_w("i_w"), "ib": stack_b("i_b"),
        "ow": stack_w("o_w"), "ob": stack_b("o_b"),
        "ln2g": stack_b("ln2_g"), "ln2b": stack_b("ln2_b"),
        "pw": params["pooler_w"],
        "pb": params["pooler_b"].reshape(1, HIDDEN),
        "cw": params["cls_w"],
        "cb": params["cls_b"].reshape(1, NUM_LABELS),
    }


# ---------------- wrapper (minimal plain-JAX glue) ----------------
def wrapper_model_forward(prepped, input_ids, attention_mask, labels):
    """Equivalent of WrapperModel.forward -> scalar cross-entropy loss."""
    B, S = input_ids.shape

    # Embedding gathers are data-dependent; keep them as JAX glue.
    we = prepped["word_emb"][input_ids]                           # (B, S, H)
    pe = prepped["pos_emb"][:S][None, :, :]
    te = prepped["type_emb"][0][None, None, :]                    # token_type_ids = 0
    x = (we + pe + te).astype(jnp.float32).reshape(B * S, HIDDEN)

    # Combined additive attention mask: key padding + cross-batch blocking, so
    # the kernel runs block-diagonal attention over all B*S rows at once.
    key_pad = ((1.0 - attention_mask.astype(jnp.float32)) * -10000.0
               ).reshape(1, B * S)
    rb = jnp.arange(B * S, dtype=jnp.int32) // S
    addmask = jnp.where(rb[:, None] == rb[None, :], 0.0, -10000.0) + key_pad

    labels2d = labels.astype(jnp.int32).reshape(B, 1)

    args = (
        x, addmask, labels2d,
        prepped["emb_ln_g"], prepped["emb_ln_b"],
        prepped["qw"], prepped["qb"], prepped["kw"], prepped["kb"],
        prepped["vw"], prepped["vb"],
        prepped["aow"], prepped["aob"], prepped["ln1g"], prepped["ln1b"],
        prepped["iw"], prepped["ib"], prepped["ow"], prepped["ob"],
        prepped["ln2g"], prepped["ln2b"],
        prepped["pw"], prepped["pb"], prepped["cw"], prepped["cb"],
    )

    out = pl.pallas_call(
        _bert_fwd_kernel,
        out_shape=jax.ShapeDtypeStruct((1, 1), jnp.float32),
        grid=(1,),
        in_specs=[_vmem_spec(a.shape) for a in args],
        out_specs=pl.BlockSpec((1, 1), lambda *_: (0, 0)),
        compiler_params=pltpu.CompilerParams(
            dimension_semantics=("arbitrary",)),
    )(*args)
    return out[0, 0]


# ---------------- pure-JAX reference (for a sanity check) ----------------
def reference_forward(params, input_ids, attention_mask, labels):
    B, S = input_ids.shape
    we = params["word_emb"][input_ids]
    pe = params["pos_emb"][:S][None, :, :]
    te = params["type_emb"][0][None, None, :]
    x = (we + pe + te).astype(jnp.float32)

    def ln(t, g, b):
        mu = t.mean(-1, keepdims=True)
        tc = t - mu
        var = (tc * tc).mean(-1, keepdims=True)
        return tc * jax.lax.rsqrt(var + LN_EPS) * g + b

    x = ln(x, params["emb_ln_g"], params["emb_ln_b"])
    mask = (1.0 - attention_mask.astype(jnp.float32)) * -10000.0
    for p in params["layers"]:
        q = x @ p["q_w"] + p["q_b"]
        k = x @ p["k_w"] + p["k_b"]
        v = x @ p["v_w"] + p["v_b"]

        def split(t):
            return t.reshape(B, S, NUM_HEADS, HEAD_DIM).transpose(0, 2, 1, 3)

        qh, kh, vh = split(q), split(k), split(v)
        s = jnp.einsum("bhqd,bhkd->bhqk", qh, kh) / math.sqrt(HEAD_DIM)
        s = s + mask[:, None, None, :]
        pm = jax.nn.softmax(s, axis=-1)
        ctx = jnp.einsum("bhqk,bhkd->bhqd", pm, vh)
        ctx = ctx.transpose(0, 2, 1, 3).reshape(B, S, HIDDEN)
        x = ln(ctx @ p["ao_w"] + p["ao_b"] + x, p["ln1_g"], p["ln1_b"])
        inter = x @ p["i_w"] + p["i_b"]
        c = math.sqrt(2.0 / math.pi)
        inter = 0.5 * inter * (1.0 + jnp.tanh(c * (inter + 0.044715 * inter ** 3)))
        x = ln(inter @ p["o_w"] + p["o_b"] + x, p["ln2_g"], p["ln2_b"])
    cls = x[:, 0, :]
    pooled = jnp.tanh(cls @ params["pooler_w"] + params["pooler_b"])
    logits = pooled @ params["cls_w"] + params["cls_b"]
    logp = jax.nn.log_softmax(logits, axis=-1)
    nll = -jnp.take_along_axis(logp, labels[:, None].astype(jnp.int32), axis=-1)
    return nll.mean()


# ---------------- param init ----------------
def init_params(key):
    keys = jax.random.split(key, 5 + 6 * NUM_LAYERS)

    def normal(k, shape):
        return (0.02 * jax.random.normal(k, shape)).astype(jnp.float32)

    params = {
        "word_emb": normal(keys[0], (VOCAB, HIDDEN)),
        "pos_emb": normal(keys[1], (MAX_POS, HIDDEN)),
        "type_emb": normal(keys[2], (2, HIDDEN)),
        "emb_ln_g": jnp.ones((HIDDEN,), jnp.float32),
        "emb_ln_b": jnp.zeros((HIDDEN,), jnp.float32),
        "pooler_w": normal(keys[3], (HIDDEN, HIDDEN)),
        "pooler_b": jnp.zeros((HIDDEN,), jnp.float32),
        "cls_w": normal(keys[4], (HIDDEN, NUM_LABELS)),
        "cls_b": jnp.zeros((NUM_LABELS,), jnp.float32),
        "layers": [],
    }
    kidx = 5
    for _ in range(NUM_LAYERS):
        lk = keys[kidx:kidx + 6]
        kidx += 6
        params["layers"].append({
            "q_w": normal(lk[0], (HIDDEN, HIDDEN)),
            "q_b": jnp.zeros((HIDDEN,), jnp.float32),
            "k_w": normal(lk[1], (HIDDEN, HIDDEN)),
            "k_b": jnp.zeros((HIDDEN,), jnp.float32),
            "v_w": normal(lk[2], (HIDDEN, HIDDEN)),
            "v_b": jnp.zeros((HIDDEN,), jnp.float32),
            "ao_w": normal(lk[3], (HIDDEN, HIDDEN)),
            "ao_b": jnp.zeros((HIDDEN,), jnp.float32),
            "ln1_g": jnp.ones((HIDDEN,), jnp.float32),
            "ln1_b": jnp.zeros((HIDDEN,), jnp.float32),
            "i_w": normal(lk[4], (HIDDEN, INTERMEDIATE)),
            "i_b": jnp.zeros((INTERMEDIATE,), jnp.float32),
            "o_w": normal(lk[5], (INTERMEDIATE, HIDDEN)),
            "o_b": jnp.zeros((HIDDEN,), jnp.float32),
            "ln2_g": jnp.ones((HIDDEN,), jnp.float32),
            "ln2_b": jnp.zeros((HIDDEN,), jnp.float32),
        })
    return params


if __name__ == "__main__":
    key = jax.random.PRNGKey(0)
    pkey, ikey, lkey = jax.random.split(key, 3)
    params = init_params(pkey)
    prepped = preprocess_params(params)     # one-time weight restructuring

    B, S = 2, 8
    input_ids = jax.random.randint(ikey, (B, S), 0, VOCAB, dtype=jnp.int32)
    attention_mask = jnp.ones((B, S), jnp.int32).at[1, 6:].set(0)
    labels = jax.random.randint(lkey, (B,), 0, NUM_LABELS, dtype=jnp.int32)

    fwd = jax.jit(wrapper_model_forward)
    loss = jax.block_until_ready(fwd(prepped, input_ids, attention_mask, labels))
    ref = jax.block_until_ready(
        reference_forward(params, input_ids, attention_mask, labels))

    assert loss.shape == () and jnp.isfinite(loss)
    assert abs(float(loss) - float(ref)) < 2e-3, (float(loss), float(ref))
    print("KERNEL_OK")
</pallas_src>

<mosaic_0001>
module attributes {stable_mosaic.version = 11 : i64} {
  func.func @_bert_fwd_kernel(%arg0: i32, %arg1: memref<16x32xf32, #tpu.memory_space<vmem>>, %arg2: memref<16x16xf32, #tpu.memory_space<vmem>>, %arg3: memref<2x1xi32, #tpu.memory_space<vmem>>, %arg4: memref<1x32xf32, #tpu.memory_space<vmem>>, %arg5: memref<1x32xf32, #tpu.memory_space<vmem>>, %arg6: memref<2x32x32xf32, #tpu.memory_space<vmem>>, %arg7: memref<2x1x32xf32, #tpu.memory_space<vmem>>, %arg8: memref<2x32x32xf32, #tpu.memory_space<vmem>>, %arg9: memref<2x1x32xf32, #tpu.memory_space<vmem>>, %arg10: memref<2x32x32xf32, #tpu.memory_space<vmem>>, %arg11: memref<2x1x32xf32, #tpu.memory_space<vmem>>, %arg12: memref<2x32x32xf32, #tpu.memory_space<vmem>>, %arg13: memref<2x1x32xf32, #tpu.memory_space<vmem>>, %arg14: memref<2x1x32xf32, #tpu.memory_space<vmem>>, %arg15: memref<2x1x32xf32, #tpu.memory_space<vmem>>, %arg16: memref<2x32x64xf32, #tpu.memory_space<vmem>>, %arg17: memref<2x1x64xf32, #tpu.memory_space<vmem>>, %arg18: memref<2x64x32xf32, #tpu.memory_space<vmem>>, %arg19: memref<2x1x32xf32, #tpu.memory_space<vmem>>, %arg20: memref<2x1x32xf32, #tpu.memory_space<vmem>>, %arg21: memref<2x1x32xf32, #tpu.memory_space<vmem>>, %arg22: memref<32x32xf32, #tpu.memory_space<vmem>>, %arg23: memref<1x32xf32, #tpu.memory_space<vmem>>, %arg24: memref<32x2xf32, #tpu.memory_space<vmem>>, %arg25: memref<1x2xf32, #tpu.memory_space<vmem>>, %arg26: memref<1x1xf32, #tpu.memory_space<vmem>>) attributes {dimension_semantics = [#tpu.dimension_semantics<arbitrary>], iteration_bounds = array<i64: 1>, scalar_prefetch = 0 : i64, scratch_operands = 0 : i64, tpu.core_type = #tpu.core_type<tc>, window_params = [{pipeline_mode = #tpu.pipeline_mode<synchronous>, transform_indices = @transform_0, window_bounds = array<i64: 16, 32>}, {pipeline_mode = #tpu.pipeline_mode<synchronous>, transform_indices = @transform_1, window_bounds = array<i64: 16, 16>}, {pipeline_mode = #tpu.pipeline_mode<synchronous>, transform_indices = @transform_2, window_bounds = array<i64: 2, 1>}, {pipeline_mode = #tpu.pipeline_mode<synchronous>, transform_indices = @transform_3, window_bounds = array<i64: 1, 32>}, {pipeline_mode = #tpu.pipeline_mode<synchronous>, transform_indices = @transform_4, window_bounds = array<i64: 1, 32>}, {pipeline_mode = #tpu.pipeline_mode<synchronous>, transform_indices = @transform_5, window_bounds = array<i64: 2, 32, 32>}, {pipeline_mode = #tpu.pipeline_mode<synchronous>, transform_indices = @transform_6, window_bounds = array<i64: 2, 1, 32>}, {pipeline_mode = #tpu.pipeline_mode<synchronous>, transform_indices = @transform_7, window_bounds = array<i64: 2, 32, 32>}, {pipeline_mode = #tpu.pipeline_mode<synchronous>, transform_indices = @transform_8, window_bounds = array<i64: 2, 1, 32>}, {pipeline_mode = #tpu.pipeline_mode<synchronous>, transform_indices = @transform_9, window_bounds = array<i64: 2, 32, 32>}, {pipeline_mode = #tpu.pipeline_mode<synchronous>, transform_indices = @transform_10, window_bounds = array<i64: 2, 1, 32>}, {pipeline_mode = #tpu.pipeline_mode<synchronous>, transform_indices = @transform_11, window_bounds = array<i64: 2, 32, 32>}, {pipeline_mode = #tpu.pipeline_mode<synchronous>, transform_indices = @transform_12, window_bounds = array<i64: 2, 1, 32>}, {pipeline_mode = #tpu.pipeline_mode<synchronous>, transform_indices = @transform_13, window_bounds = array<i64: 2, 1, 32>}, {pipeline_mode = #tpu.pipeline_mode<synchronous>, transform_indices = @transform_14, window_bounds = array<i64: 2, 1, 32>}, {pipeline_mode = #tpu.pipeline_mode<synchronous>, transform_indices = @transform_15, window_bounds = array<i64: 2, 32, 64>}, {pipeline_mode = #tpu.pipeline_mode<synchronous>, transform_indices = @transform_16, window_bounds = array<i64: 2, 1, 64>}, {pipeline_mode = #tpu.pipeline_mode<synchronous>, transform_indices = @transform_17, window_bounds = array<i64: 2, 64, 32>}, {pipeline_mode = #tpu.pipeline_mode<synchronous>, transform_indices = @transform_18, window_bounds = array<i64: 2, 1, 32>}, {pipeline_mode = #tpu.pipeline_mode<synchronous>, transform_indices = @transform_19, window_bounds = array<i64: 2, 1, 32>}, {pipeline_mode = #tpu.pipeline_mode<synchronous>, transform_indices = @transform_20, window_bounds = array<i64: 2, 1, 32>}, {pipeline_mode = #tpu.pipeline_mode<synchronous>, transform_indices = @transform_21, window_bounds = array<i64: 32, 32>}, {pipeline_mode = #tpu.pipeline_mode<synchronous>, transform_indices = @transform_22, window_bounds = array<i64: 1, 32>}, {pipeline_mode = #tpu.pipeline_mode<synchronous>, transform_indices = @transform_23, window_bounds = array<i64: 32, 2>}, {pipeline_mode = #tpu.pipeline_mode<synchronous>, transform_indices = @transform_24, window_bounds = array<i64: 1, 2>}, {pipeline_mode = #tpu.pipeline_mode<synchronous>, transform_indices = @transform_25, window_bounds = array<i64: 1, 1>}]} {
    %c0 = arith.constant 0 : index
    %c0_0 = arith.constant 0 : index
    %0 = vector.load %arg2[%c0, %c0_0] : memref<16x16xf32, #tpu.memory_space<vmem>>, vector<16x16xf32>
    %1 = tpu.iota {dimensions = array<i32: 1>} : vector<1x32xi32>
    %c0_i32 = arith.constant 0 : i32
    %2 = vector.broadcast %c0_i32 : i32 to vector<1x32xi32>
    %3 = arith.cmpi sge, %1, %2 : vector<1x32xi32>
    %c16_i32 = arith.constant 16 : i32
    %4 = vector.broadcast %c16_i32 : i32 to vector<1x32xi32>
    %5 = arith.cmpi slt, %1, %4 : vector<1x32xi32>
    %6 = arith.andi %3, %5 : vector<1x32xi1>
    %7 = arith.extui %6 : vector<1x32xi1> to vector<1x32xi32>
    %8 = arith.sitofp %7 : vector<1x32xi32> to vector<1x32xf32>
    %c16_i32_1 = arith.constant 16 : i32
    %9 = vector.broadcast %c16_i32_1 : i32 to vector<1x32xi32>
    %10 = arith.cmpi sge, %1, %9 : vector<1x32xi32>
    %c32_i32 = arith.constant 32 : i32
    %11 = vector.broadcast %c32_i32 : i32 to vector<1x32xi32>
    %12 = arith.cmpi slt, %1, %11 : vector<1x32xi32>
    %13 = arith.andi %10, %12 : vector<1x32xi1>
    %14 = arith.extui %13 : vector<1x32xi1> to vector<1x32xi32>
    %15 = arith.sitofp %14 : vector<1x32xi32> to vector<1x32xf32>
    %16 = tpu.iota {dimensions = array<i32: 0>} : vector<2x16xi32>
    %17 = tpu.iota {dimensions = array<i32: 1>} : vector<2x16xi32>
    %c8_i32 = arith.constant 8 : i32
    %18 = vector.broadcast %c8_i32 : i32 to vector<2x16xi32>
    %19 = arith.muli %16, %18 : vector<2x16xi32>
    %20 = arith.cmpi eq, %17, %19 : vector<2x16xi32>
    %21 = arith.extui %20 : vector<2x16xi1> to vector<2x16xi32>
    %22 = arith.sitofp %21 : vector<2x16xi32> to vector<2x16xf32>
    %c0_2 = arith.constant 0 : index
    %c0_3 = arith.constant 0 : index
    %23 = vector.load %arg1[%c0_2, %c0_3] : memref<16x32xf32, #tpu.memory_space<vmem>>, vector<16x32xf32>
    %c0_4 = arith.constant 0 : index
    %c0_5 = arith.constant 0 : index
    %24 = vector.load %arg4[%c0_4, %c0_5] : memref<1x32xf32, #tpu.memory_space<vmem>>, vector<1x32xf32>
    %c0_6 = arith.constant 0 : index
    %c0_7 = arith.constant 0 : index
    %25 = vector.load %arg5[%c0_6, %c0_7] : memref<1x32xf32, #tpu.memory_space<vmem>>, vector<1x32xf32>
    %cst = arith.constant dense<0.000000e+00> : vector<16xf32>
    %26 = vector.multi_reduction <add>, %23, %cst [1] : vector<16x32xf32> to vector<16xf32>
    %27 = vector.shape_cast %26 : vector<16xf32> to vector<16x1xf32>
    %cst_8 = arith.constant 3.200000e+01 : f32
    %28 = vector.broadcast %cst_8 : f32 to vector<16x1xf32>
    %29 = arith.divf %27, %28 : vector<16x1xf32>
    %30 = vector.broadcast %29 : vector<16x1xf32> to vector<16x32xf32>
    %31 = arith.subf %23, %30 : vector<16x32xf32>
    %32 = arith.mulf %31, %31 : vector<16x32xf32>
    %cst_9 = arith.constant dense<0.000000e+00> : vector<16xf32>
    %33 = vector.multi_reduction <add>, %32, %cst_9 [1] : vector<16x32xf32> to vector<16xf32>
    %34 = vector.shape_cast %33 : vector<16xf32> to vector<16x1xf32>
    %cst_10 = arith.constant 3.200000e+01 : f32
    %35 = vector.broadcast %cst_10 : f32 to vector<16x1xf32>
    %36 = arith.divf %34, %35 : vector<16x1xf32>
    %cst_11 = arith.constant 9.99999996E-13 : f32
    %37 = vector.broadcast %cst_11 : f32 to vector<16x1xf32>
    %38 = arith.addf %36, %37 : vector<16x1xf32>
    %39 = math.rsqrt %38 : vector<16x1xf32>
    %40 = vector.broadcast %39 : vector<16x1xf32> to vector<16x32xf32>
    %41 = arith.mulf %31, %40 : vector<16x32xf32>
    %42 = vector.broadcast %24 : vector<1x32xf32> to vector<16x32xf32>
    %43 = arith.mulf %41, %42 : vector<16x32xf32>
    %44 = vector.broadcast %25 : vector<1x32xf32> to vector<16x32xf32>
    %45 = arith.addf %43, %44 : vector<16x32xf32>
    %c0_12 = arith.constant 0 : index
    %c0_13 = arith.constant 0 : index
    %c0_14 = arith.constant 0 : index
    %46 = vector.load %arg6[%c0_12, %c0_13, %c0_14] : memref<2x32x32xf32, #tpu.memory_space<vmem>>, vector<1x32x32xf32>
    %47 = vector.shape_cast %46 : vector<1x32x32xf32> to vector<32x32xf32>
    %cst_15 = arith.constant dense<0.000000e+00> : vector<16x32xf32>
    %48 = tpu.matmul %45, %47, %cst_15 {dimension_numbers = #tpu.dot_dimension_numbers<[1], [0], [0], [1], [0, 0, 1, 1], [], []>} : vector<16x32xf32>, vector<32x32xf32>, vector<16x32xf32> -> vector<16x32xf32>
    %c0_16 = arith.constant 0 : index
    %c0_17 = arith.constant 0 : index
    %c0_18 = arith.constant 0 : index
    %49 = vector.load %arg7[%c0_16, %c0_17, %c0_18] : memref<2x1x32xf32, #tpu.memory_space<vmem>>, vector<1x1x32xf32>
    %50 = vector.shape_cast %49 : vector<1x1x32xf32> to vector<1x32xf32>
    %51 = vector.broadcast %50 : vector<1x32xf32> to vector<16x32xf32>
    %52 = arith.addf %48, %51 : vector<16x32xf32>
    %c0_19 = arith.constant 0 : index
    %c0_20 = arith.constant 0 : index
    %c0_21 = arith.constant 0 : index
    %53 = vector.load %arg8[%c0_19, %c0_20, %c0_21] : memref<2x32x32xf32, #tpu.memory_space<vmem>>, vector<1x32x32xf32>
    %54 = vector.shape_cast %53 : vector<1x32x32xf32> to vector<32x32xf32>
    %cst_22 = arith.constant dense<0.000000e+00> : vector<16x32xf32>
    %55 = tpu.matmul %45, %54, %cst_22 {dimension_numbers = #tpu.dot_dimension_numbers<[1], [0], [0], [1], [0, 0, 1, 1], [], []>} : vector<16x32xf32>, vector<32x32xf32>, vector<16x32xf32> -> vector<16x32xf32>
    %c0_23 = arith.constant 0 : index
    %c0_24 = arith.constant 0 : index
    %c0_25 = arith.constant 0 : index
    %56 = vector.load %arg9[%c0_23, %c0_24, %c0_25] : memref<2x1x32xf32, #tpu.memory_space<vmem>>, vector<1x1x32xf32>
    %57 = vector.shape_cast %56 : vector<1x1x32xf32> to vector<1x32xf32>
    %58 = vector.broadcast %57 : vector<1x32xf32> to vector<16x32xf32>
    %59 = arith.addf %55, %58 : vector<16x32xf32>
    %c0_26 = arith.constant 0 : index
    %c0_27 = arith.constant 0 : index
    %c0_28 = arith.constant 0 : index
    %60 = vector.load %arg10[%c0_26, %c0_27, %c0_28] : memref<2x32x32xf32, #tpu.memory_space<vmem>>, vector<1x32x32xf32>
    %61 = vector.shape_cast %60 : vector<1x32x32xf32> to vector<32x32xf32>
    %cst_29 = arith.constant dense<0.000000e+00> : vector<16x32xf32>
    %62 = tpu.matmul %45, %61, %cst_29 {dimension_numbers = #tpu.dot_dimension_numbers<[1], [0], [0], [1], [0, 0, 1, 1], [], []>} : vector<16x32xf32>, vector<32x32xf32>, vector<16x32xf32> -> vector<16x32xf32>
    %c0_30 = arith.constant 0 : index
    %c0_31 = arith.constant 0 : index
    %c0_32 = arith.constant 0 : index
    %63 = vector.load %arg11[%c0_30, %c0_31, %c0_32] : memref<2x1x32xf32, #tpu.memory_space<vmem>>, vector<1x1x32xf32>
    %64 = vector.shape_cast %63 : vector<1x1x32xf32> to vector<1x32xf32>
    %65 = vector.broadcast %64 : vector<1x32xf32> to vector<16x32xf32>
    %66 = arith.addf %62, %65 : vector<16x32xf32>
    %67 = vector.broadcast %8 : vector<1x32xf32> to vector<16x32xf32>
    %68 = arith.mulf %59, %67 : vector<16x32xf32>
    %69 = vector.broadcast %8 : vector<1x32xf32> to vector<16x32xf32>
    %70 = arith.mulf %66, %69 : vector<16x32xf32>
    %cst_33 = arith.constant dense<0.000000e+00> : vector<16x16xf32>
    %71 = tpu.matmul %52, %68, %cst_33 {dimension_numbers = #tpu.dot_dimension_numbers<[1], [1], [0], [0], [0, 0, 1, 0], [], []>} : vector<16x32xf32>, vector<16x32xf32>, vector<16x16xf32> -> vector<16x16xf32>
    %72 = arith.addf %71, %0 : vector<16x16xf32>
    %cst_34 = arith.constant dense<0xFF800000> : vector<16xf32>
    %73 = vector.multi_reduction <maximumf>, %72, %cst_34 [1] : vector<16x16xf32> to vector<16xf32>
    %74 = vector.shape_cast %73 : vector<16xf32> to vector<16x1xf32>
    %75 = vector.broadcast %74 : vector<16x1xf32> to vector<16x16xf32>
    %76 = arith.subf %72, %75 : vector<16x16xf32>
    %77 = math.exp %76 : vector<16x16xf32>
    %cst_35 = arith.constant dense<0.000000e+00> : vector<16xf32>
    %78 = vector.multi_reduction <add>, %77, %cst_35 [1] : vector<16x16xf32> to vector<16xf32>
    %79 = vector.shape_cast %78 : vector<16xf32> to vector<16x1xf32>
    %80 = tpu.reciprocal %79 {approx = true} : vector<16x1xf32> -> vector<16x1xf32>
    %81 = vector.broadcast %80 : vector<16x1xf32> to vector<16x16xf32>
    %82 = arith.mulf %77, %81 : vector<16x16xf32>
    %cst_36 = arith.constant dense<0.000000e+00> : vector<16x32xf32>
    %83 = tpu.matmul %82, %70, %cst_36 {dimension_numbers = #tpu.dot_dimension_numbers<[1], [0], [0], [1], [0, 0, 1, 1], [], []>} : vector<16x16xf32>, vector<16x32xf32>, vector<16x32xf32> -> vector<16x32xf32>
    %84 = vector.broadcast %15 : vector<1x32xf32> to vector<16x32xf32>
    %85 = arith.mulf %59, %84 : vector<16x32xf32>
    %86 = vector.broadcast %15 : vector<1x32xf32> to vector<16x32xf32>
    %87 = arith.mulf %66, %86 : vector<16x32xf32>
    %cst_37 = arith.constant dense<0.000000e+00> : vector<16x16xf32>
    %88 = tpu.matmul %52, %85, %cst_37 {dimension_numbers = #tpu.dot_dimension_numbers<[1], [1], [0], [0], [0, 0, 1, 0], [], []>} : vector<16x32xf32>, vector<16x32xf32>, vector<16x16xf32> -> vector<16x16xf32>
    %89 = arith.addf %88, %0 : vector<16x16xf32>
    %cst_38 = arith.constant dense<0xFF800000> : vector<16xf32>
    %90 = vector.multi_reduction <maximumf>, %89, %cst_38 [1] : vector<16x16xf32> to vector<16xf32>
    %91 = vector.shape_cast %90 : vector<16xf32> to vector<16x1xf32>
    %92 = vector.broadcast %91 : vector<16x1xf32> to vector<16x16xf32>
    %93 = arith.subf %89, %92 : vector<16x16xf32>
    %94 = math.exp %93 : vector<16x16xf32>
    %cst_39 = arith.constant dense<0.000000e+00> : vector<16xf32>
    %95 = vector.multi_reduction <add>, %94, %cst_39 [1] : vector<16x16xf32> to vector<16xf32>
    %96 = vector.shape_cast %95 : vector<16xf32> to vector<16x1xf32>
    %97 = tpu.reciprocal %96 {approx = true} : vector<16x1xf32> -> vector<16x1xf32>
    %98 = vector.broadcast %97 : vector<16x1xf32> to vector<16x16xf32>
    %99 = arith.mulf %94, %98 : vector<16x16xf32>
    %cst_40 = arith.constant dense<0.000000e+00> : vector<16x32xf32>
    %100 = tpu.matmul %99, %87, %cst_40 {dimension_numbers = #tpu.dot_dimension_numbers<[1], [0], [0], [1], [0, 0, 1, 1], [], []>} : vector<16x16xf32>, vector<16x32xf32>, vector<16x32xf32> -> vector<16x32xf32>
    %101 = arith.addf %83, %100 : vector<16x32xf32>
    %c0_41 = arith.constant 0 : index
    %c0_42 = arith.constant 0 : index
    %c0_43 = arith.constant 0 : index
    %102 = vector.load %arg12[%c0_41, %c0_42, %c0_43] : memref<2x32x32xf32, #tpu.memory_space<vmem>>, vector<1x32x32xf32>
    %103 = vector.shape_cast %102 : vector<1x32x32xf32> to vector<32x32xf32>
    %cst_44 = arith.constant dense<0.000000e+00> : vector<16x32xf32>
    %104 = tpu.matmul %101, %103, %cst_44 {dimension_numbers = #tpu.dot_dimension_numbers<[1], [0], [0], [1], [0, 0, 1, 1], [], []>} : vector<16x32xf32>, vector<32x32xf32>, vector<16x32xf32> -> vector<16x32xf32>
    %c0_45 = arith.constant 0 : index
    %c0_46 = arith.constant 0 : index
    %c0_47 = arith.constant 0 : index
    %105 = vector.load %arg13[%c0_45, %c0_46, %c0_47] : memref<2x1x32xf32, #tpu.memory_space<vmem>>, vector<1x1x32xf32>
    %106 = vector.shape_cast %105 : vector<1x1x32xf32> to vector<1x32xf32>
    %107 = vector.broadcast %106 : vector<1x32xf32> to vector<16x32xf32>
    %108 = arith.addf %104, %107 : vector<16x32xf32>
    %109 = arith.addf %108, %45 : vector<16x32xf32>
    %c0_48 = arith.constant 0 : index
    %c0_49 = arith.constant 0 : index
    %c0_50 = arith.constant 0 : index
    %110 = vector.load %arg14[%c0_48, %c0_49, %c0_50] : memref<2x1x32xf32, #tpu.memory_space<vmem>>, vector<1x1x32xf32>
    %111 = vector.shape_cast %110 : vector<1x1x32xf32> to vector<1x32xf32>
    %c0_51 = arith.constant 0 : index
    %c0_52 = arith.constant 0 : index
    %c0_53 = arith.constant 0 : index
    %112 = vector.load %arg15[%c0_51, %c0_52, %c0_53] : memref<2x1x32xf32, #tpu.memory_space<vmem>>, vector<1x1x32xf32>
    %113 = vector.shape_cast %112 : vector<1x1x32xf32> to vector<1x32xf32>
    %cst_54 = arith.constant dense<0.000000e+00> : vector<16xf32>
    %114 = vector.multi_reduction <add>, %109, %cst_54 [1] : vector<16x32xf32> to vector<16xf32>
    %115 = vector.shape_cast %114 : vector<16xf32> to vector<16x1xf32>
    %cst_55 = arith.constant 3.200000e+01 : f32
    %116 = vector.broadcast %cst_55 : f32 to vector<16x1xf32>
    %117 = arith.divf %115, %116 : vector<16x1xf32>
    %118 = vector.broadcast %117 : vector<16x1xf32> to vector<16x32xf32>
    %119 = arith.subf %109, %118 : vector<16x32xf32>
    %120 = arith.mulf %119, %119 : vector<16x32xf32>
    %cst_56 = arith.constant dense<0.000000e+00> : vector<16xf32>
    %121 = vector.multi_reduction <add>, %120, %cst_56 [1] : vector<16x32xf32> to vector<16xf32>
    %122 = vector.shape_cast %121 : vector<16xf32> to vector<16x1xf32>
    %cst_57 = arith.constant 3.200000e+01 : f32
    %123 = vector.broadcast %cst_57 : f32 to vector<16x1xf32>
    %124 = arith.divf %122, %123 : vector<16x1xf32>
    %cst_58 = arith.constant 9.99999996E-13 : f32
    %125 = vector.broadcast %cst_58 : f32 to vector<16x1xf32>
    %126 = arith.addf %124, %125 : vector<16x1xf32>
    %127 = math.rsqrt %126 : vector<16x1xf32>
    %128 = vector.broadcast %127 : vector<16x1xf32> to vector<16x32xf32>
    %129 = arith.mulf %119, %128 : vector<16x32xf32>
    %130 = vector.broadcast %111 : vector<1x32xf32> to vector<16x32xf32>
    %131 = arith.mulf %129, %130 : vector<16x32xf32>
    %132 = vector.broadcast %113 : vector<1x32xf32> to vector<16x32xf32>
    %133 = arith.addf %131, %132 : vector<16x32xf32>
    %c0_59 = arith.constant 0 : index
    %c0_60 = arith.constant 0 : index
    %c0_61 = arith.constant 0 : index
    %134 = vector.load %arg16[%c0_59, %c0_60, %c0_61] : memref<2x32x64xf32, #tpu.memory_space<vmem>>, vector<1x32x64xf32>
    %135 = vector.shape_cast %134 : vector<1x32x64xf32> to vector<32x64xf32>
    %cst_62 = arith.constant dense<0.000000e+00> : vector<16x64xf32>
    %136 = tpu.matmul %133, %135, %cst_62 {dimension_numbers = #tpu.dot_dimension_numbers<[1], [0], [0], [1], [0, 0, 1, 1], [], []>} : vector<16x32xf32>, vector<32x64xf32>, vector<16x64xf32> -> vector<16x64xf32>
    %c0_63 = arith.constant 0 : index
    %c0_64 = arith.constant 0 : index
    %c0_65 = arith.constant 0 : index
    %137 = vector.load %arg17[%c0_63, %c0_64, %c0_65] : memref<2x1x64xf32, #tpu.memory_space<vmem>>, vector<1x1x64xf32>
    %138 = vector.shape_cast %137 : vector<1x1x64xf32> to vector<1x64xf32>
    %139 = vector.broadcast %138 : vector<1x64xf32> to vector<16x64xf32>
    %140 = arith.addf %136, %139 : vector<16x64xf32>
    %cst_66 = arith.constant 5.000000e-01 : f32
    %141 = vector.broadcast %cst_66 : f32 to vector<16x64xf32>
    %142 = arith.mulf %141, %140 : vector<16x64xf32>
    %cst_67 = arith.constant 4.471500e-02 : f32
    %143 = vector.broadcast %cst_67 : f32 to vector<16x64xf32>
    %144 = arith.mulf %143, %140 : vector<16x64xf32>
    %145 = arith.mulf %144, %140 : vector<16x64xf32>
    %146 = arith.mulf %145, %140 : vector<16x64xf32>
    %147 = arith.addf %140, %146 : vector<16x64xf32>
    %cst_68 = arith.constant 0.797884583 : f32
    %148 = vector.broadcast %cst_68 : f32 to vector<16x64xf32>
    %149 = arith.mulf %148, %147 : vector<16x64xf32>
    %150 = math.tanh %149 : vector<16x64xf32>
    %cst_69 = arith.constant 1.000000e+00 : f32
    %151 = vector.broadcast %cst_69 : f32 to vector<16x64xf32>
    %152 = arith.addf %151, %150 : vector<16x64xf32>
    %153 = arith.mulf %142, %152 : vector<16x64xf32>
    %c0_70 = arith.constant 0 : index
    %c0_71 = arith.constant 0 : index
    %c0_72 = arith.constant 0 : index
    %154 = vector.load %arg18[%c0_70, %c0_71, %c0_72] : memref<2x64x32xf32, #tpu.memory_space<vmem>>, vector<1x64x32xf32>
    %155 = vector.shape_cast %154 : vector<1x64x32xf32> to vector<64x32xf32>
    %cst_73 = arith.constant dense<0.000000e+00> : vector<16x32xf32>
    %156 = tpu.matmul %153, %155, %cst_73 {dimension_numbers = #tpu.dot_dimension_numbers<[1], [0], [0], [1], [0, 0, 1, 1], [], []>} : vector<16x64xf32>, vector<64x32xf32>, vector<16x32xf32> -> vector<16x32xf32>
    %c0_74 = arith.constant 0 : index
    %c0_75 = arith.constant 0 : index
    %c0_76 = arith.constant 0 : index
    %157 = vector.load %arg19[%c0_74, %c0_75, %c0_76] : memref<2x1x32xf32, #tpu.memory_space<vmem>>, vector<1x1x32xf32>
    %158 = vector.shape_cast %157 : vector<1x1x32xf32> to vector<1x32xf32>
    %159 = vector.broadcast %158 : vector<1x32xf32> to vector<16x32xf32>
    %160 = arith.addf %156, %159 : vector<16x32xf32>
    %161 = arith.addf %160, %133 : vector<16x32xf32>
    %c0_77 = arith.constant 0 : index
    %c0_78 = arith.constant 0 : index
    %c0_79 = arith.constant 0 : index
    %162 = vector.load %arg20[%c0_77, %c0_78, %c0_79] : memref<2x1x32xf32, #tpu.memory_space<vmem>>, vector<1x1x32xf32>
    %163 = vector.shape_cast %162 : vector<1x1x32xf32> to vector<1x32xf32>
    %c0_80 = arith.constant 0 : index
    %c0_81 = arith.constant 0 : index
    %c0_82 = arith.constant 0 : index
    %164 = vector.load %arg21[%c0_80, %c0_81, %c0_82] : memref<2x1x32xf32, #tpu.memory_space<vmem>>, vector<1x1x32xf32>
    %165 = vector.shape_cast %164 : vector<1x1x32xf32> to vector<1x32xf32>
    %cst_83 = arith.constant dense<0.000000e+00> : vector<16xf32>
    %166 = vector.multi_reduction <add>, %161, %cst_83 [1] : vector<16x32xf32> to vector<16xf32>
    %167 = vector.shape_cast %166 : vector<16xf32> to vector<16x1xf32>
    %cst_84 = arith.constant 3.200000e+01 : f32
    %168 = vector.broadcast %cst_84 : f32 to vector<16x1xf32>
    %169 = arith.divf %167, %168 : vector<16x1xf32>
    %170 = vector.broadcast %169 : vector<16x1xf32> to vector<16x32xf32>
    %171 = arith.subf %161, %170 : vector<16x32xf32>
    %172 = arith.mulf %171, %171 : vector<16x32xf32>
    %cst_85 = arith.constant dense<0.000000e+00> : vector<16xf32>
    %173 = vector.multi_reduction <add>, %172, %cst_85 [1] : vector<16x32xf32> to vector<16xf32>
    %174 = vector.shape_cast %173 : vector<16xf32> to vector<16x1xf32>
    %cst_86 = arith.constant 3.200000e+01 : f32
    %175 = vector.broadcast %cst_86 : f32 to vector<16x1xf32>
    %176 = arith.divf %174, %175 : vector<16x1xf32>
    %cst_87 = arith.constant 9.99999996E-13 : f32
    %177 = vector.broadcast %cst_87 : f32 to vector<16x1xf32>
    %178 = arith.addf %176, %177 : vector<16x1xf32>
    %179 = math.rsqrt %178 : vector<16x1xf32>
    %180 = vector.broadcast %179 : vector<16x1xf32> to vector<16x32xf32>
    %181 = arith.mulf %171, %180 : vector<16x32xf32>
    %182 = vector.broadcast %163 : vector<1x32xf32> to vector<16x32xf32>
    %183 = arith.mulf %181, %182 : vector<16x32xf32>
    %184 = vector.broadcast %165 : vector<1x32xf32> to vector<16x32xf32>
    %185 = arith.addf %183, %184 : vector<16x32xf32>
    %c1 = arith.constant 1 : index
    %c0_88 = arith.constant 0 : index
    %c0_89 = arith.constant 0 : index
    %186 = vector.load %arg6[%c1, %c0_88, %c0_89] : memref<2x32x32xf32, #tpu.memory_space<vmem>>, vector<1x32x32xf32>
    %187 = vector.shape_cast %186 : vector<1x32x32xf32> to vector<32x32xf32>
    %cst_90 = arith.constant dense<0.000000e+00> : vector<16x32xf32>
    %188 = tpu.matmul %185, %187, %cst_90 {dimension_numbers = #tpu.dot_dimension_numbers<[1], [0], [0], [1], [0, 0, 1, 1], [], []>} : vector<16x32xf32>, vector<32x32xf32>, vector<16x32xf32> -> vector<16x32xf32>
    %c1_91 = arith.constant 1 : index
    %c0_92 = arith.constant 0 : index
    %c0_93 = arith.constant 0 : index
    %189 = vector.load %arg7[%c1_91, %c0_92, %c0_93] : memref<2x1x32xf32, #tpu.memory_space<vmem>>, vector<1x1x32xf32>
    %190 = vector.shape_cast %189 : vector<1x1x32xf32> to vector<1x32xf32>
    %191 = vector.broadcast %190 : vector<1x32xf32> to vector<16x32xf32>
    %192 = arith.addf %188, %191 : vector<16x32xf32>
    %c1_94 = arith.constant 1 : index
    %c0_95 = arith.constant 0 : index
    %c0_96 = arith.constant 0 : index
    %193 = vector.load %arg8[%c1_94, %c0_95, %c0_96] : memref<2x32x32xf32, #tpu.memory_space<vmem>>, vector<1x32x32xf32>
    %194 = vector.shape_cast %193 : vector<1x32x32xf32> to vector<32x32xf32>
    %cst_97 = arith.constant dense<0.000000e+00> : vector<16x32xf32>
    %195 = tpu.matmul %185, %194, %cst_97 {dimension_numbers = #tpu.dot_dimension_numbers<[1], [0], [0], [1], [0, 0, 1, 1], [], []>} : vector<16x32xf32>, vector<32x32xf32>, vector<16x32xf32> -> vector<16x32xf32>
    %c1_98 = arith.constant 1 : index
    %c0_99 = arith.constant 0 : index
    %c0_100 = arith.constant 0 : index
    %196 = vector.load %arg9[%c1_98, %c0_99, %c0_100] : memref<2x1x32xf32, #tpu.memory_space<vmem>>, vector<1x1x32xf32>
    %197 = vector.shape_cast %196 : vector<1x1x32xf32> to vector<1x32xf32>
    %198 = vector.broadcast %197 : vector<1x32xf32> to vector<16x32xf32>
    %199 = arith.addf %195, %198 : vector<16x32xf32>
    %c1_101 = arith.constant 1 : index
    %c0_102 = arith.constant 0 : index
    %c0_103 = arith.constant 0 : index
    %200 = vector.load %arg10[%c1_101, %c0_102, %c0_103] : memref<2x32x32xf32, #tpu.memory_space<vmem>>, vector<1x32x32xf32>
    %201 = vector.shape_cast %200 : vector<1x32x32xf32> to vector<32x32xf32>
    %cst_104 = arith.constant dense<0.000000e+00> : vector<16x32xf32>
    %202 = tpu.matmul %185, %201, %cst_104 {dimension_numbers = #tpu.dot_dimension_numbers<[1], [0], [0], [1], [0, 0, 1, 1], [], []>} : vector<16x32xf32>, vector<32x32xf32>, vector<16x32xf32> -> vector<16x32xf32>
    %c1_105 = arith.constant 1 : index
    %c0_106 = arith.constant 0 : index
    %c0_107 = arith.constant 0 : index
    %203 = vector.load %arg11[%c1_105, %c0_106, %c0_107] : memref<2x1x32xf32, #tpu.memory_space<vmem>>, vector<1x1x32xf32>
    %204 = vector.shape_cast %203 : vector<1x1x32xf32> to vector<1x32xf32>
    %205 = vector.broadcast %204 : vector<1x32xf32> to vector<16x32xf32>
    %206 = arith.addf %202, %205 : vector<16x32xf32>
    %207 = vector.broadcast %8 : vector<1x32xf32> to vector<16x32xf32>
    %208 = arith.mulf %199, %207 : vector<16x32xf32>
    %209 = vector.broadcast %8 : vector<1x32xf32> to vector<16x32xf32>
    %210 = arith.mulf %206, %209 : vector<16x32xf32>
    %cst_108 = arith.constant dense<0.000000e+00> : vector<16x16xf32>
    %211 = tpu.matmul %192, %208, %cst_108 {dimension_numbers = #tpu.dot_dimension_numbers<[1], [1], [0], [0], [0, 0, 1, 0], [], []>} : vector<16x32xf32>, vector<16x32xf32>, vector<16x16xf32> -> vector<16x16xf32>
    %212 = arith.addf %211, %0 : vector<16x16xf32>
    %cst_109 = arith.constant dense<0xFF800000> : vector<16xf32>
    %213 = vector.multi_reduction <maximumf>, %212, %cst_109 [1] : vector<16x16xf32> to vector<16xf32>
    %214 = vector.shape_cast %213 : vector<16xf32> to vector<16x1xf32>
    %215 = vector.broadcast %214 : vector<16x1xf32> to vector<16x16xf32>
    %216 = arith.subf %212, %215 : vector<16x16xf32>
    %217 = math.exp %216 : vector<16x16xf32>
    %cst_110 = arith.constant dense<0.000000e+00> : vector<16xf32>
    %218 = vector.multi_reduction <add>, %217, %cst_110 [1] : vector<16x16xf32> to vector<16xf32>
    %219 = vector.shape_cast %218 : vector<16xf32> to vector<16x1xf32>
    %220 = tpu.reciprocal %219 {approx = true} : vector<16x1xf32> -> vector<16x1xf32>
    %221 = vector.broadcast %220 : vector<16x1xf32> to vector<16x16xf32>
    %222 = arith.mulf %217, %221 : vector<16x16xf32>
    %cst_111 = arith.constant dense<0.000000e+00> : vector<16x32xf32>
    %223 = tpu.matmul %222, %210, %cst_111 {dimension_numbers = #tpu.dot_dimension_numbers<[1], [0], [0], [1], [0, 0, 1, 1], [], []>} : vector<16x16xf32>, vector<16x32xf32>, vector<16x32xf32> -> vector<16x32xf32>
    %224 = vector.broadcast %15 : vector<1x32xf32> to vector<16x32xf32>
    %225 = arith.mulf %199, %224 : vector<16x32xf32>
    %226 = vector.broadcast %15 : vector<1x32xf32> to vector<16x32xf32>
    %227 = arith.mulf %206, %226 : vector<16x32xf32>
    %cst_112 = arith.constant dense<0.000000e+00> : vector<16x16xf32>
    %228 = tpu.matmul %192, %225, %cst_112 {dimension_numbers = #tpu.dot_dimension_numbers<[1], [1], [0], [0], [0, 0, 1, 0], [], []>} : vector<16x32xf32>, vector<16x32xf32>, vector<16x16xf32> -> vector<16x16xf32>
    %229 = arith.addf %228, %0 : vector<16x16xf32>
    %cst_113 = arith.constant dense<0xFF800000> : vector<16xf32>
    %230 = vector.multi_reduction <maximumf>, %229, %cst_113 [1] : vector<16x16xf32> to vector<16xf32>
    %231 = vector.shape_cast %230 : vector<16xf32> to vector<16x1xf32>
    %232 = vector.broadcast %231 : vector<16x1xf32> to vector<16x16xf32>
    %233 = arith.subf %229, %232 : vector<16x16xf32>
    %234 = math.exp %233 : vector<16x16xf32>
    %cst_114 = arith.constant dense<0.000000e+00> : vector<16xf32>
    %235 = vector.multi_reduction <add>, %234, %cst_114 [1] : vector<16x16xf32> to vector<16xf32>
    %236 = vector.shape_cast %235 : vector<16xf32> to vector<16x1xf32>
    %237 = tpu.reciprocal %236 {approx = true} : vector<16x1xf32> -> vector<16x1xf32>
    %238 = vector.broadcast %237 : vector<16x1xf32> to vector<16x16xf32>
    %239 = arith.mulf %234, %238 : vector<16x16xf32>
    %cst_115 = arith.constant dense<0.000000e+00> : vector<16x32xf32>
    %240 = tpu.matmul %239, %227, %cst_115 {dimension_numbers = #tpu.dot_dimension_numbers<[1], [0], [0], [1], [0, 0, 1, 1], [], []>} : vector<16x16xf32>, vector<16x32xf32>, vector<16x32xf32> -> vector<16x32xf32>
    %241 = arith.addf %223, %240 : vector<16x32xf32>
    %c1_116 = arith.constant 1 : index
    %c0_117 = arith.constant 0 : index
    %c0_118 = arith.constant 0 : index
    %242 = vector.load %arg12[%c1_116, %c0_117, %c0_118] : memref<2x32x32xf32, #tpu.memory_space<vmem>>, vector<1x32x32xf32>
    %243 = vector.shape_cast %242 : vector<1x32x32xf32> to vector<32x32xf32>
    %cst_119 = arith.constant dense<0.000000e+00> : vector<16x32xf32>
    %244 = tpu.matmul %241, %243, %cst_119 {dimension_numbers = #tpu.dot_dimension_numbers<[1], [0], [0], [1], [0, 0, 1, 1], [], []>} : vector<16x32xf32>, vector<32x32xf32>, vector<16x32xf32> -> vector<16x32xf32>
    %c1_120 = arith.constant 1 : index
    %c0_121 = arith.constant 0 : index
    %c0_122 = arith.constant 0 : index
    %245 = vector.load %arg13[%c1_120, %c0_121, %c0_122] : memref<2x1x32xf32, #tpu.memory_space<vmem>>, vector<1x1x32xf32>
    %246 = vector.shape_cast %245 : vector<1x1x32xf32> to vector<1x32xf32>
    %247 = vector.broadcast %246 : vector<1x32xf32> to vector<16x32xf32>
    %248 = arith.addf %244, %247 : vector<16x32xf32>
    %249 = arith.addf %248, %185 : vector<16x32xf32>
    %c1_123 = arith.constant 1 : index
    %c0_124 = arith.constant 0 : index
    %c0_125 = arith.constant 0 : index
    %250 = vector.load %arg14[%c1_123, %c0_124, %c0_125] : memref<2x1x32xf32, #tpu.memory_space<vmem>>, vector<1x1x32xf32>
    %251 = vector.shape_cast %250 : vector<1x1x32xf32> to vector<1x32xf32>
    %c1_126 = arith.constant 1 : index
    %c0_127 = arith.constant 0 : index
    %c0_128 = arith.constant 0 : index
    %252 = vector.load %arg15[%c1_126, %c0_127, %c0_128] : memref<2x1x32xf32, #tpu.memory_space<vmem>>, vector<1x1x32xf32>
    %253 = vector.shape_cast %252 : vector<1x1x32xf32> to vector<1x32xf32>
    %cst_129 = arith.constant dense<0.000000e+00> : vector<16xf32>
    %254 = vector.multi_reduction <add>, %249, %cst_129 [1] : vector<16x32xf32> to vector<16xf32>
    %255 = vector.shape_cast %254 : vector<16xf32> to vector<16x1xf32>
    %cst_130 = arith.constant 3.200000e+01 : f32
    %256 = vector.broadcast %cst_130 : f32 to vector<16x1xf32>
    %257 = arith.divf %255, %256 : vector<16x1xf32>
    %258 = vector.broadcast %257 : vector<16x1xf32> to vector<16x32xf32>
    %259 = arith.subf %249, %258 : vector<16x32xf32>
    %260 = arith.mulf %259, %259 : vector<16x32xf32>
    %cst_131 = arith.constant dense<0.000000e+00> : vector<16xf32>
    %261 = vector.multi_reduction <add>, %260, %cst_131 [1] : vector<16x32xf32> to vector<16xf32>
    %262 = vector.shape_cast %261 : vector<16xf32> to vector<16x1xf32>
    %cst_132 = arith.constant 3.200000e+01 : f32
    %263 = vector.broadcast %cst_132 : f32 to vector<16x1xf32>
    %264 = arith.divf %262, %263 : vector<16x1xf32>
    %cst_133 = arith.constant 9.99999996E-13 : f32
    %265 = vector.broadcast %cst_133 : f32 to vector<16x1xf32>
    %266 = arith.addf %264, %265 : vector<16x1xf32>
    %267 = math.rsqrt %266 : vector<16x1xf32>
    %268 = vector.broadcast %267 : vector<16x1xf32> to vector<16x32xf32>
    %269 = arith.mulf %259, %268 : vector<16x32xf32>
    %270 = vector.broadcast %251 : vector<1x32xf32> to vector<16x32xf32>
    %271 = arith.mulf %269, %270 : vector<16x32xf32>
    %272 = vector.broadcast %253 : vector<1x32xf32> to vector<16x32xf32>
    %273 = arith.addf %271, %272 : vector<16x32xf32>
    %c1_134 = arith.constant 1 : index
    %c0_135 = arith.constant 0 : index
    %c0_136 = arith.constant 0 : index
    %274 = vector.load %arg16[%c1_134, %c0_135, %c0_136] : memref<2x32x64xf32, #tpu.memory_space<vmem>>, vector<1x32x64xf32>
    %275 = vector.shape_cast %274 : vector<1x32x64xf32> to vector<32x64xf32>
    %cst_137 = arith.constant dense<0.000000e+00> : vector<16x64xf32>
    %276 = tpu.matmul %273, %275, %cst_137 {dimension_numbers = #tpu.dot_dimension_numbers<[1], [0], [0], [1], [0, 0, 1, 1], [], []>} : vector<16x32xf32>, vector<32x64xf32>, vector<16x64xf32> -> vector<16x64xf32>
    %c1_138 = arith.constant 1 : index
    %c0_139 = arith.constant 0 : index
    %c0_140 = arith.constant 0 : index
    %277 = vector.load %arg17[%c1_138, %c0_139, %c0_140] : memref<2x1x64xf32, #tpu.memory_space<vmem>>, vector<1x1x64xf32>
    %278 = vector.shape_cast %277 : vector<1x1x64xf32> to vector<1x64xf32>
    %279 = vector.broadcast %278 : vector<1x64xf32> to vector<16x64xf32>
    %280 = arith.addf %276, %279 : vector<16x64xf32>
    %cst_141 = arith.constant 5.000000e-01 : f32
    %281 = vector.broadcast %cst_141 : f32 to vector<16x64xf32>
    %282 = arith.mulf %281, %280 : vector<16x64xf32>
    %cst_142 = arith.constant 4.471500e-02 : f32
    %283 = vector.broadcast %cst_142 : f32 to vector<16x64xf32>
    %284 = arith.mulf %283, %280 : vector<16x64xf32>
    %285 = arith.mulf %284, %280 : vector<16x64xf32>
    %286 = arith.mulf %285, %280 : vector<16x64xf32>
    %287 = arith.addf %280, %286 : vector<16x64xf32>
    %cst_143 = arith.constant 0.797884583 : f32
    %288 = vector.broadcast %cst_143 : f32 to vector<16x64xf32>
    %289 = arith.mulf %288, %287 : vector<16x64xf32>
    %290 = math.tanh %289 : vector<16x64xf32>
    %cst_144 = arith.constant 1.000000e+00 : f32
    %291 = vector.broadcast %cst_144 : f32 to vector<16x64xf32>
    %292 = arith.addf %291, %290 : vector<16x64xf32>
    %293 = arith.mulf %282, %292 : vector<16x64xf32>
    %c1_145 = arith.constant 1 : index
    %c0_146 = arith.constant 0 : index
    %c0_147 = arith.constant 0 : index
    %294 = vector.load %arg18[%c1_145, %c0_146, %c0_147] : memref<2x64x32xf32, #tpu.memory_space<vmem>>, vector<1x64x32xf32>
    %295 = vector.shape_cast %294 : vector<1x64x32xf32> to vector<64x32xf32>
    %cst_148 = arith.constant dense<0.000000e+00> : vector<16x32xf32>
    %296 = tpu.matmul %293, %295, %cst_148 {dimension_numbers = #tpu.dot_dimension_numbers<[1], [0], [0], [1], [0, 0, 1, 1], [], []>} : vector<16x64xf32>, vector<64x32xf32>, vector<16x32xf32> -> vector<16x32xf32>
    %c1_149 = arith.constant 1 : index
    %c0_150 = arith.constant 0 : index
    %c0_151 = arith.constant 0 : index
    %297 = vector.load %arg19[%c1_149, %c0_150, %c0_151] : memref<2x1x32xf32, #tpu.memory_space<vmem>>, vector<1x1x32xf32>
    %298 = vector.shape_cast %297 : vector<1x1x32xf32> to vector<1x32xf32>
    %299 = vector.broadcast %298 : vector<1x32xf32> to vector<16x32xf32>
    %300 = arith.addf %296, %299 : vector<16x32xf32>
    %301 = arith.addf %300, %273 : vector<16x32xf32>
    %c1_152 = arith.constant 1 : index
    %c0_153 = arith.constant 0 : index
    %c0_154 = arith.constant 0 : index
    %302 = vector.load %arg20[%c1_152, %c0_153, %c0_154] : memref<2x1x32xf32, #tpu.memory_space<vmem>>, vector<1x1x32xf32>
    %303 = vector.shape_cast %302 : vector<1x1x32xf32> to vector<1x32xf32>
    %c1_155 = arith.constant 1 : index
    %c0_156 = arith.constant 0 : index
    %c0_157 = arith.constant 0 : index
    %304 = vector.load %arg21[%c1_155, %c0_156, %c0_157] : memref<2x1x32xf32, #tpu.memory_space<vmem>>, vector<1x1x32xf32>
    %305 = vector.shape_cast %304 : vector<1x1x32xf32> to vector<1x32xf32>
    %cst_158 = arith.constant dense<0.000000e+00> : vector<16xf32>
    %306 = vector.multi_reduction <add>, %301, %cst_158 [1] : vector<16x32xf32> to vector<16xf32>
    %307 = vector.shape_cast %306 : vector<16xf32> to vector<16x1xf32>
    %cst_159 = arith.constant 3.200000e+01 : f32
    %308 = vector.broadcast %cst_159 : f32 to vector<16x1xf32>
    %309 = arith.divf %307, %308 : vector<16x1xf32>
    %310 = vector.broadcast %309 : vector<16x1xf32> to vector<16x32xf32>
    %311 = arith.subf %301, %310 : vector<16x32xf32>
    %312 = arith.mulf %311, %311 : vector<16x32xf32>
    %cst_160 = arith.constant dense<0.000000e+00> : vector<16xf32>
    %313 = vector.multi_reduction <add>, %312, %cst_160 [1] : vector<16x32xf32> to vector<16xf32>
    %314 = vector.shape_cast %313 : vector<16xf32> to vector<16x1xf32>
    %cst_161 = arith.constant 3.200000e+01 : f32
    %315 = vector.broadcast %cst_161 : f32 to vector<16x1xf32>
    %316 = arith.divf %314, %315 : vector<16x1xf32>
    %cst_162 = arith.constant 9.99999996E-13 : f32
    %317 = vector.broadcast %cst_162 : f32 to vector<16x1xf32>
    %318 = arith.addf %316, %317 : vector<16x1xf32>
    %319 = math.rsqrt %318 : vector<16x1xf32>
    %320 = vector.broadcast %319 : vector<16x1xf32> to vector<16x32xf32>
    %321 = arith.mulf %311, %320 : vector<16x32xf32>
    %322 = vector.broadcast %303 : vector<1x32xf32> to vector<16x32xf32>
    %323 = arith.mulf %321, %322 : vector<16x32xf32>
    %324 = vector.broadcast %305 : vector<1x32xf32> to vector<16x32xf32>
    %325 = arith.addf %323, %324 : vector<16x32xf32>
    %cst_163 = arith.constant dense<0.000000e+00> : vector<2x32xf32>
    %326 = tpu.matmul %22, %325, %cst_163 {dimension_numbers = #tpu.dot_dimension_numbers<[1], [0], [0], [1], [0, 0, 1, 1], [], []>} : vector<2x16xf32>, vector<16x32xf32>, vector<2x32xf32> -> vector<2x32xf32>
    %c0_164 = arith.constant 0 : index
    %c0_165 = arith.constant 0 : index
    %327 = vector.load %arg22[%c0_164, %c0_165] : memref<32x32xf32, #tpu.memory_space<vmem>>, vector<32x32xf32>
    %cst_166 = arith.constant dense<0.000000e+00> : vector<2x32xf32>
    %328 = tpu.matmul %326, %327, %cst_166 {dimension_numbers = #tpu.dot_dimension_numbers<[1], [0], [0], [1], [0, 0, 1, 1], [], []>} : vector<2x32xf32>, vector<32x32xf32>, vector<2x32xf32> -> vector<2x32xf32>
    %c0_167 = arith.constant 0 : index
    %c0_168 = arith.constant 0 : index
    %329 = vector.load %arg23[%c0_167, %c0_168] : memref<1x32xf32, #tpu.memory_space<vmem>>, vector<1x32xf32>
    %330 = vector.broadcast %329 : vector<1x32xf32> to vector<2x32xf32>
    %331 = arith.addf %328, %330 : vector<2x32xf32>
    %332 = math.tanh %331 : vector<2x32xf32>
    %c0_169 = arith.constant 0 : index
    %c0_170 = arith.constant 0 : index
    %333 = vector.load %arg24[%c0_169, %c0_170] : memref<32x2xf32, #tpu.memory_space<vmem>>, vector<32x2xf32>
    %cst_171 = arith.constant dense<0.000000e+00> : vector<2x2xf32>
    %334 = tpu.matmul %332, %333, %cst_171 {dimension_numbers = #tpu.dot_dimension_numbers<[1], [0], [0], [1], [0, 0, 1, 1], [], []>} : vector<2x32xf32>, vector<32x2xf32>, vector<2x2xf32> -> vector<2x2xf32>
    %c0_172 = arith.constant 0 : index
    %c0_173 = arith.constant 0 : index
    %335 = vector.load %arg25[%c0_172, %c0_173] : memref<1x2xf32, #tpu.memory_space<vmem>>, vector<1x2xf32>
    %336 = vector.broadcast %335 : vector<1x2xf32> to vector<2x2xf32>
    %337 = arith.addf %334, %336 : vector<2x2xf32>
    %c0_174 = arith.constant 0 : index
    %c0_175 = arith.constant 0 : index
    %338 = vector.load %arg3[%c0_174, %c0_175] : memref<2x1xi32, #tpu.memory_space<vmem>>, vector<2x1xi32>
    %339 = tpu.iota {dimensions = array<i32: 1>} : vector<2x2xi32>
    %340 = vector.broadcast %338 : vector<2x1xi32> to vector<2x2xi32>
    %341 = arith.cmpi eq, %339, %340 : vector<2x2xi32>
    %342 = arith.extui %341 : vector<2x2xi1> to vector<2x2xi32>
    %343 = arith.sitofp %342 : vector<2x2xi32> to vector<2x2xf32>
    %cst_176 = arith.constant dense<0xFF800000> : vector<2xf32>
    %344 = vector.multi_reduction <maximumf>, %337, %cst_176 [1] : vector<2x2xf32> to vector<2xf32>
    %345 = vector.shape_cast %344 : vector<2xf32> to vector<2x1xf32>
    %346 = vector.broadcast %345 : vector<2x1xf32> to vector<2x2xf32>
    %347 = arith.subf %337, %346 : vector<2x2xf32>
    %348 = math.exp %347 : vector<2x2xf32>
    %cst_177 = arith.constant dense<0.000000e+00> : vector<2xf32>
    %349 = vector.multi_reduction <add>, %348, %cst_177 [1] : vector<2x2xf32> to vector<2xf32>
    %350 = vector.shape_cast %349 : vector<2xf32> to vector<2x1xf32>
    %351 = math.log %350 : vector<2x1xf32>
    %352 = arith.addf %351, %345 : vector<2x1xf32>
    %353 = arith.mulf %337, %343 : vector<2x2xf32>
    %cst_178 = arith.constant dense<0.000000e+00> : vector<2xf32>
    %354 = vector.multi_reduction <add>, %353, %cst_178 [1] : vector<2x2xf32> to vector<2xf32>
    %355 = vector.shape_cast %354 : vector<2xf32> to vector<2x1xf32>
    %356 = arith.subf %352, %355 : vector<2x1xf32>
    %357 = vector.shape_cast %356 : vector<2x1xf32> to vector<1x2x1xf32>
    %cst_179 = arith.constant dense<0.000000e+00> : vector<1xf32>
    %358 = vector.multi_reduction <add>, %357, %cst_179 [1, 2] : vector<1x2x1xf32> to vector<1xf32>
    %359 = vector.shape_cast %358 : vector<1xf32> to vector<1x1x1xf32>
    %360 = vector.extract %359[0, 0, 0] : f32 from vector<1x1x1xf32>
    %361 = vector.broadcast %360 : f32 to vector<1x1xf32>
    %cst_180 = arith.constant 5.000000e-01 : f32
    %362 = vector.broadcast %cst_180 : f32 to vector<1x1xf32>
    %363 = arith.mulf %361, %362 : vector<1x1xf32>
    %c0_181 = arith.constant 0 : index
    %c0_182 = arith.constant 0 : index
    %364 = vector.load %arg26[%c0_181, %c0_182] : memref<1x1xf32, #tpu.memory_space<vmem>>, vector<1x1xf32>
    tpu.vector_store %arg26[%c0_181, %c0_182], %363 {strides = array<i32>} : memref<1x1xf32, #tpu.memory_space<vmem>>, vector<1x1xf32>,
    return
  }
  func.func @transform_0(%arg0: i32) -> (i32, i32) {
    %c0_i32 = arith.constant 0 : i32
    %c0_i32_0 = arith.constant 0 : i32
    %c0_i32_1 = arith.constant 0 : i32
    return %c0_i32, %c0_i32_0 : i32, i32
  }
  func.func @transform_1(%arg0: i32) -> (i32, i32) {
    %c0_i32 = arith.constant 0 : i32
    %c0_i32_0 = arith.constant 0 : i32
    %c0_i32_1 = arith.constant 0 : i32
    return %c0_i32, %c0_i32_0 : i32, i32
  }
  func.func @transform_2(%arg0: i32) -> (i32, i32) {
    %c0_i32 = arith.constant 0 : i32
    %c0_i32_0 = arith.constant 0 : i32
    %c0_i32_1 = arith.constant 0 : i32
    return %c0_i32, %c0_i32_0 : i32, i32
  }
  func.func @transform_3(%arg0: i32) -> (i32, i32) {
    %c0_i32 = arith.constant 0 : i32
    %c0_i32_0 = arith.constant 0 : i32
    %c0_i32_1 = arith.constant 0 : i32
    return %c0_i32, %c0_i32_0 : i32, i32
  }
  func.func @transform_4(%arg0: i32) -> (i32, i32) {
    %c0_i32 = arith.constant 0 : i32
    %c0_i32_0 = arith.constant 0 : i32
    %c0_i32_1 = arith.constant 0 : i32
    return %c0_i32, %c0_i32_0 : i32, i32
  }
  func.func @transform_5(%arg0: i32) -> (i32, i32, i32) {
    %c0_i32 = arith.constant 0 : i32
    %c0_i32_0 = arith.constant 0 : i32
    %c0_i32_1 = arith.constant 0 : i32
    %c0_i32_2 = arith.constant 0 : i32
    return %c0_i32, %c0_i32_0, %c0_i32_1 : i32, i32, i32
  }
  func.func @transform_6(%arg0: i32) -> (i32, i32, i32) {
    %c0_i32 = arith.constant 0 : i32
    %c0_i32_0 = arith.constant 0 : i32
    %c0_i32_1 = arith.constant 0 : i32
    %c0_i32_2 = arith.constant 0 : i32
    return %c0_i32, %c0_i32_0, %c0_i32_1 : i32, i32, i32
  }
  func.func @transform_7(%arg0: i32) -> (i32, i32, i32) {
    %c0_i32 = arith.constant 0 : i32
    %c0_i32_0 = arith.constant 0 : i32
    %c0_i32_1 = arith.constant 0 : i32
    %c0_i32_2 = arith.constant 0 : i32
    return %c0_i32, %c0_i32_0, %c0_i32_1 : i32, i32, i32
  }
  func.func @transform_8(%arg0: i32) -> (i32, i32, i32) {
    %c0_i32 = arith.constant 0 : i32
    %c0_i32_0 = arith.constant 0 : i32
    %c0_i32_1 = arith.constant 0 : i32
    %c0_i32_2 = arith.constant 0 : i32
    return %c0_i32, %c0_i32_0, %c0_i32_1 : i32, i32, i32
  }
  func.func @transform_9(%arg0: i32) -> (i32, i32, i32) {
    %c0_i32 = arith.constant 0 : i32
    %c0_i32_0 = arith.constant 0 : i32
    %c0_i32_1 = arith.constant 0 : i32
    %c0_i32_2 = arith.constant 0 : i32
    return %c0_i32, %c0_i32_0, %c0_i32_1 : i32, i32, i32
  }
  func.func @transform_10(%arg0: i32) -> (i32, i32, i32) {
    %c0_i32 = arith.constant 0 : i32
    %c0_i32_0 = arith.constant 0 : i32
    %c0_i32_1 = arith.constant 0 : i32
    %c0_i32_2 = arith.constant 0 : i32
    return %c0_i32, %c0_i32_0, %c0_i32_1 : i32, i32, i32
  }
  func.func @transform_11(%arg0: i32) -> (i32, i32, i32) {
    %c0_i32 = arith.constant 0 : i32
    %c0_i32_0 = arith.constant 0 : i32
    %c0_i32_1 = arith.constant 0 : i32
    %c0_i32_2 = arith.constant 0 : i32
    return %c0_i32, %c0_i32_0, %c0_i32_1 : i32, i32, i32
  }
  func.func @transform_12(%arg0: i32) -> (i32, i32, i32) {
    %c0_i32 = arith.constant 0 : i32
    %c0_i32_0 = arith.constant 0 : i32
    %c0_i32_1 = arith.constant 0 : i32
    %c0_i32_2 = arith.constant 0 : i32
    return %c0_i32, %c0_i32_0, %c0_i32_1 : i32, i32, i32
  }
  func.func @transform_13(%arg0: i32) -> (i32, i32, i32) {
    %c0_i32 = arith.constant 0 : i32
    %c0_i32_0 = arith.constant 0 : i32
    %c0_i32_1 = arith.constant 0 : i32
    %c0_i32_2 = arith.constant 0 : i32
    return %c0_i32, %c0_i32_0, %c0_i32_1 : i32, i32, i32
  }
  func.func @transform_14(%arg0: i32) -> (i32, i32, i32) {
    %c0_i32 = arith.constant 0 : i32
    %c0_i32_0 = arith.constant 0 : i32
    %c0_i32_1 = arith.constant 0 : i32
    %c0_i32_2 = arith.constant 0 : i32
    return %c0_i32, %c0_i32_0, %c0_i32_1 : i32, i32, i32
  }
  func.func @transform_15(%arg0: i32) -> (i32, i32, i32) {
    %c0_i32 = arith.constant 0 : i32
    %c0_i32_0 = arith.constant 0 : i32
    %c0_i32_1 = arith.constant 0 : i32
    %c0_i32_2 = arith.constant 0 : i32
    return %c0_i32, %c0_i32_0, %c0_i32_1 : i32, i32, i32
  }
  func.func @transform_16(%arg0: i32) -> (i32, i32, i32) {
    %c0_i32 = arith.constant 0 : i32
    %c0_i32_0 = arith.constant 0 : i32
    %c0_i32_1 = arith.constant 0 : i32
    %c0_i32_2 = arith.constant 0 : i32
    return %c0_i32, %c0_i32_0, %c0_i32_1 : i32, i32, i32
  }
  func.func @transform_17(%arg0: i32) -> (i32, i32, i32) {
    %c0_i32 = arith.constant 0 : i32
    %c0_i32_0 = arith.constant 0 : i32
    %c0_i32_1 = arith.constant 0 : i32
    %c0_i32_2 = arith.constant 0 : i32
    return %c0_i32, %c0_i32_0, %c0_i32_1 : i32, i32, i32
  }
  func.func @transform_18(%arg0: i32) -> (i32, i32, i32) {
    %c0_i32 = arith.constant 0 : i32
    %c0_i32_0 = arith.constant 0 : i32
    %c0_i32_1 = arith.constant 0 : i32
    %c0_i32_2 = arith.constant 0 : i32
    return %c0_i32, %c0_i32_0, %c0_i32_1 : i32, i32, i32
  }
  func.func @transform_19(%arg0: i32) -> (i32, i32, i32) {
    %c0_i32 = arith.constant 0 : i32
    %c0_i32_0 = arith.constant 0 : i32
    %c0_i32_1 = arith.constant 0 : i32
    %c0_i32_2 = arith.constant 0 : i32
    return %c0_i32, %c0_i32_0, %c0_i32_1 : i32, i32, i32
  }
  func.func @transform_20(%arg0: i32) -> (i32, i32, i32) {
    %c0_i32 = arith.constant 0 : i32
    %c0_i32_0 = arith.constant 0 : i32
    %c0_i32_1 = arith.constant 0 : i32
    %c0_i32_2 = arith.constant 0 : i32
    return %c0_i32, %c0_i32_0, %c0_i32_1 : i32, i32, i32
  }
  func.func @transform_21(%arg0: i32) -> (i32, i32) {
    %c0_i32 = arith.constant 0 : i32
    %c0_i32_0 = arith.constant 0 : i32
    %c0_i32_1 = arith.constant 0 : i32
    return %c0_i32, %c0_i32_0 : i32, i32
  }
  func.func @transform_22(%arg0: i32) -> (i32, i32) {
    %c0_i32 = arith.constant 0 : i32
    %c0_i32_0 = arith.constant 0 : i32
    %c0_i32_1 = arith.constant 0 : i32
    return %c0_i32, %c0_i32_0 : i32, i32
  }
  func.func @transform_23(%arg0: i32) -> (i32, i32) {
    %c0_i32 = arith.constant 0 : i32
    %c0_i32_0 = arith.constant 0 : i32
    %c0_i32_1 = arith.constant 0 : i32
    return %c0_i32, %c0_i32_0 : i32, i32
  }
  func.func @transform_24(%arg0: i32) -> (i32, i32) {
    %c0_i32 = arith.constant 0 : i32
    %c0_i32_0 = arith.constant 0 : i32
    %c0_i32_1 = arith.constant 0 : i32
    return %c0_i32, %c0_i32_0 : i32, i32
  }
  func.func @transform_25(%arg0: i32) -> (i32, i32) {
    %c0_i32 = arith.constant 0 : i32
    %c0_i32_0 = arith.constant 0 : i32
    %c0_i32_1 = arith.constant 0 : i32
    return %c0_i32, %c0_i32_0 : i32, i32
  }
}

</mosaic_0001>

<llo_original>
// kernel: wrapper_model_forward.1
$region0: #{wrapper_model_forward.1}
  #allocation0 [shape = 'u32[]', space=smem, size = 0x4, offset = 0x4, fixed_abs, tag = 'smem constant byte address 0x4 - core index']
  #allocation1 [shape = 'u32[72,128]{1,0:T(1,128)}', space=vmem, size = 0x9000, scoped, tag = 'internal scratch']
  %s0 = inlined_call_operand.vmem [shape: f32[16,32], index: 0, kind: input, shape index: {}]
  %s1 = inlined_call_operand.vmem [shape: f32[16,16], index: 1, kind: input, shape index: {}]
  %s2 = inlined_call_operand.vmem [shape: s32[2,1], index: 2, kind: input, shape index: {}]
  %s3 = inlined_call_operand.vmem [shape: f32[1,32], index: 3, kind: input, shape index: {}]
  %s4 = inlined_call_operand.vmem [shape: f32[1,32], index: 4, kind: input, shape index: {}]
  %s5 = inlined_call_operand.vmem [shape: f32[2,32,32], index: 5, kind: input, shape index: {}]
  %s6 = inlined_call_operand.vmem [shape: f32[2,1,32], index: 6, kind: input, shape index: {}]
  %s7 = inlined_call_operand.vmem [shape: f32[2,32,32], index: 7, kind: input, shape index: {}]
  %s8 = inlined_call_operand.vmem [shape: f32[2,1,32], index: 8, kind: input, shape index: {}]
  %s9 = inlined_call_operand.vmem [shape: f32[2,32,32], index: 9, kind: input, shape index: {}]
  %s10 = inlined_call_operand.vmem [shape: f32[2,1,32], index: 10, kind: input, shape index: {}]
  %s11 = inlined_call_operand.vmem [shape: f32[2,32,32], index: 11, kind: input, shape index: {}]
  %s12 = inlined_call_operand.vmem [shape: f32[2,1,32], index: 12, kind: input, shape index: {}]
  %s13 = inlined_call_operand.vmem [shape: f32[2,1,32], index: 13, kind: input, shape index: {}]
  %s14 = inlined_call_operand.vmem [shape: f32[2,1,32], index: 14, kind: input, shape index: {}]
  %s15 = inlined_call_operand.vmem [shape: f32[2,32,64], index: 15, kind: input, shape index: {}]
  %s16 = inlined_call_operand.vmem [shape: f32[2,1,64], index: 16, kind: input, shape index: {}]
  %s17 = inlined_call_operand.vmem [shape: f32[2,64,32], index: 17, kind: input, shape index: {}]
  %s18 = inlined_call_operand.vmem [shape: f32[2,1,32], index: 18, kind: input, shape index: {}]
  %s19 = inlined_call_operand.vmem [shape: f32[2,1,32], index: 19, kind: input, shape index: {}]
  %s20 = inlined_call_operand.vmem [shape: f32[2,1,32], index: 20, kind: input, shape index: {}]
  %s21 = inlined_call_operand.vmem [shape: f32[32,32], index: 21, kind: input, shape index: {}]
  %s22 = inlined_call_operand.vmem [shape: f32[1,32], index: 22, kind: input, shape index: {}]
  %s23 = inlined_call_operand.vmem [shape: f32[32,2], index: 23, kind: input, shape index: {}]
  %s24 = inlined_call_operand.vmem [shape: f32[1,2], index: 24, kind: input, shape index: {}]
  %s25 = inlined_call_operand.hbm [shape: f32[1,1], index: 25, kind: output, shape index: {}]
  %s26 = sld [smem:[#allocation0]]
  $region110: #{wrapper_model_forward.1} parent=0
    _
  %s28 = ssub.s32 1, %s26
  %s29 = scalar_select 0, %s28, %s26
  $region1: #{wrapper_model_forward.1} parent=0
    #allocation2 [shape = 'u8[512]{0}', space=vmem, size = 0x400, scoped, tag = 'output window, operand 0, single buffered']
    #allocation3 [shape = 's32[1]{0}', space=sflag, size = 0x4, scoped, tag = 'scoped memory for wrapper_model_forward.1']
    %30 = vsyncpa [#allocation3], 0
    // Predicated region
    $region2: #{wrapper_model_forward.1} parent=1 // pred_check
      _
    $region3: #{wrapper_model_forward.1} parent=1 // pred_check_branch
      %32 = sbr.rel (0) target = $region5
    $region4: #{wrapper_model_forward.1} parent=1 // pred_region
      _
    $region5: #{wrapper_model_forward.1} parent=1 // pred_fallthru
      _
    // Predicated region
    $region6: #{wrapper_model_forward.1} parent=1 // pred_check
      _
    $region7: #{wrapper_model_forward.1} parent=1 // pred_check_branch
      %34 = sbr.rel (0) target = $region9
    $region8: #{wrapper_model_forward.1} parent=1 // pred_region
      _
    $region9: #{wrapper_model_forward.1} parent=1 // pred_fallthru
      _
    // Predicated region
    $region10: #{wrapper_model_forward.1} parent=1 // pred_check
      _
    $region11: #{wrapper_model_forward.1} parent=1 // pred_check_branch
      %36 = sbr.rel (0) target = $region13
    $region12: #{wrapper_model_forward.1} parent=1 // pred_region
      _
    $region13: #{wrapper_model_forward.1} parent=1 // pred_fallthru
      _
    // Predicated region
    $region14: #{wrapper_model_forward.1} parent=1 // pred_check
      _
    $region15: #{wrapper_model_forward.1} parent=1 // pred_check_branch
      %38 = sbr.rel (0) target = $region17
    $region16: #{wrapper_model_forward.1} parent=1 // pred_region
      _
    $region17: #{wrapper_model_forward.1} parent=1 // pred_fallthru
      _
    // Predicated region
    $region18: #{wrapper_model_forward.1} parent=1 // pred_check
      _
    $region19: #{wrapper_model_forward.1} parent=1 // pred_check_branch
      %40 = sbr.rel (0) target = $region21
    $region20: #{wrapper_model_forward.1} parent=1 // pred_region
      _
    $region21: #{wrapper_model_forward.1} parent=1 // pred_fallthru
      _
    // Predicated region
    $region22: #{wrapper_model_forward.1} parent=1 // pred_check
      _
    $region23: #{wrapper_model_forward.1} parent=1 // pred_check_branch
      %42 = sbr.rel (0) target = $region25
    $region24: #{wrapper_model_forward.1} parent=1 // pred_region
      _
    $region25: #{wrapper_model_forward.1} parent=1 // pred_fallthru
      _
    // Predicated region
    $region26: #{wrapper_model_forward.1} parent=1 // pred_check
      _
    $region27: #{wrapper_model_forward.1} parent=1 // pred_check_branch
      %44 = sbr.rel (0) target = $region29
    $region28: #{wrapper_model_forward.1} parent=1 // pred_region
      _
    $region29: #{wrapper_model_forward.1} parent=1 // pred_fallthru
      _
    // Predicated region
    $region30: #{wrapper_model_forward.1} parent=1 // pred_check
      _
    $region31: #{wrapper_model_forward.1} parent=1 // pred_check_branch
      %46 = sbr.rel (0) target = $region33
    $region32: #{wrapper_model_forward.1} parent=1 // pred_region
      _
    $region33: #{wrapper_model_forward.1} parent=1 // pred_fallthru
      _
    // Predicated region
    $region34: #{wrapper_model_forward.1} parent=1 // pred_check
      _
    $region35: #{wrapper_model_forward.1} parent=1 // pred_check_branch
      %48 = sbr.rel (0) target = $region37
    $region36: #{wrapper_model_forward.1} parent=1 // pred_region
      _
    $region37: #{wrapper_model_forward.1} parent=1 // pred_fallthru
      _
    // Predicated region
    $region38: #{wrapper_model_forward.1} parent=1 // pred_check
      _
    $region39: #{wrapper_model_forward.1} parent=1 // pred_check_branch
      %50 = sbr.rel (0) target = $region41
    $region40: #{wrapper_model_forward.1} parent=1 // pred_region
      _
    $region41: #{wrapper_model_forward.1} parent=1 // pred_fallthru
      _
    // Predicated region
    $region42: #{wrapper_model_forward.1} parent=1 // pred_check
      _
    $region43: #{wrapper_model_forward.1} parent=1 // pred_check_branch
      %52 = sbr.rel (0) target = $region45
    $region44: #{wrapper_model_forward.1} parent=1 // pred_region
      _
    $region45: #{wrapper_model_forward.1} parent=1 // pred_fallthru
      _
    // Predicated region
    $region46: #{wrapper_model_forward.1} parent=1 // pred_check
      _
    $region47: #{wrapper_model_forward.1} parent=1 // pred_check_branch
      %54 = sbr.rel (0) target = $region49
    $region48: #{wrapper_model_forward.1} parent=1 // pred_region
      _
    $region49: #{wrapper_model_forward.1} parent=1 // pred_fallthru
      _
    // Predicated region
    $region50: #{wrapper_model_forward.1} parent=1 // pred_check
      _
    $region51: #{wrapper_model_forward.1} parent=1 // pred_check_branch
      %56 = sbr.rel (0) target = $region53
    $region52: #{wrapper_model_forward.1} parent=1 // pred_region
      _
    $region53: #{wrapper_model_forward.1} parent=1 // pred_fallthru
      _
    // Predicated region
    $region54: #{wrapper_model_forward.1} parent=1 // pred_check
      _
    $region55: #{wrapper_model_forward.1} parent=1 // pred_check_branch
      %58 = sbr.rel (0) target = $region57
    $region56: #{wrapper_model_forward.1} parent=1 // pred_region
      _
    $region57: #{wrapper_model_forward.1} parent=1 // pred_fallthru
      _
    // Predicated region
    $region58: #{wrapper_model_forward.1} parent=1 // pred_check
      _
    $region59: #{wrapper_model_forward.1} parent=1 // pred_check_branch
      %60 = sbr.rel (0) target = $region61
    $region60: #{wrapper_model_forward.1} parent=1 // pred_region
      _
    $region61: #{wrapper_model_forward.1} parent=1 // pred_fallthru
      _
    // Predicated region
    $region62: #{wrapper_model_forward.1} parent=1 // pred_check
      _
    $region63: #{wrapper_model_forward.1} parent=1 // pred_check_branch
      %62 = sbr.rel (0) target = $region65
    $region64: #{wrapper_model_forward.1} parent=1 // pred_region
      _
    $region65: #{wrapper_model_forward.1} parent=1 // pred_fallthru
      _
    // Predicated region
    $region66: #{wrapper_model_forward.1} parent=1 // pred_check
      _
    $region67: #{wrapper_model_forward.1} parent=1 // pred_check_branch
      %64 = sbr.rel (0) target = $region69
    $region68: #{wrapper_model_forward.1} parent=1 // pred_region
      _
    $region69: #{wrapper_model_forward.1} parent=1 // pred_fallthru
      _
    // Predicated region
    $region70: #{wrapper_model_forward.1} parent=1 // pred_check
      _
    $region71: #{wrapper_model_forward.1} parent=1 // pred_check_branch
      %66 = sbr.rel (0) target = $region73
    $region72: #{wrapper_model_forward.1} parent=1 // pred_region
      _
    $region73: #{wrapper_model_forward.1} parent=1 // pred_fallthru
      _
    // Predicated region
    $region74: #{wrapper_model_forward.1} parent=1 // pred_check
      _
    $region75: #{wrapper_model_forward.1} parent=1 // pred_check_branch
      %68 = sbr.rel (0) target = $region77
    $region76: #{wrapper_model_forward.1} parent=1 // pred_region
      _
    $region77: #{wrapper_model_forward.1} parent=1 // pred_fallthru
      _
    // Predicated region
    $region78: #{wrapper_model_forward.1} parent=1 // pred_check
      _
    $region79: #{wrapper_model_forward.1} parent=1 // pred_check_branch
      %70 = sbr.rel (0) target = $region81
    $region80: #{wrapper_model_forward.1} parent=1 // pred_region
      _
    $region81: #{wrapper_model_forward.1} parent=1 // pred_fallthru
      _
    // Predicated region
    $region82: #{wrapper_model_forward.1} parent=1 // pred_check
      _
    $region83: #{wrapper_model_forward.1} parent=1 // pred_check_branch
      %72 = sbr.rel (0) target = $region85
    $region84: #{wrapper_model_forward.1} parent=1 // pred_region
      _
    $region85: #{wrapper_model_forward.1} parent=1 // pred_fallthru
      _
    // Predicated region
    $region86: #{wrapper_model_forward.1} parent=1 // pred_check
      _
    $region87: #{wrapper_model_forward.1} parent=1 // pred_check_branch
      %74 = sbr.rel (0) target = $region89
    $region88: #{wrapper_model_forward.1} parent=1 // pred_region
      _
    $region89: #{wrapper_model_forward.1} parent=1 // pred_fallthru
      _
    // Predicated region
    $region90: #{wrapper_model_forward.1} parent=1 // pred_check
      _
    $region91: #{wrapper_model_forward.1} parent=1 // pred_check_branch
      %76 = sbr.rel (0) target = $region93
    $region92: #{wrapper_model_forward.1} parent=1 // pred_region
      _
    $region93: #{wrapper_model_forward.1} parent=1 // pred_fallthru
      _
    // Predicated region
    $region94: #{wrapper_model_forward.1} parent=1 // pred_check
      _
    $region95: #{wrapper_model_forward.1} parent=1 // pred_check_branch
      %78 = sbr.rel (0) target = $region97
    $region96: #{wrapper_model_forward.1} parent=1 // pred_region
      _
    $region97: #{wrapper_model_forward.1} parent=1 // pred_fallthru
      _
    // Predicated region
    $region98: #{wrapper_model_forward.1} parent=1 // pred_check
      _
    $region99: #{wrapper_model_forward.1} parent=1 // pred_check_branch
      %80 = sbr.rel (0) target = $region101
    $region100: #{wrapper_model_forward.1} parent=1 // pred_region
      _
    $region101: #{wrapper_model_forward.1} parent=1 // pred_fallthru
      _
    %v81 = vld [vmem:[%s1] sm:$0xff]
    %v82 = vld [vmem:[%s1 + $0x8] sm:$0xff]
    %v83 = vlaneseq
    %v84 = vand.u32 %v83, 127
    %vm85 = vcmp.ge.s32.totalorder %v84, 0
    %vm86 = vcmp.lt.s32.totalorder %v84, 16
    %vm87 = vmand %vm85, %vm86
    %v88 = vsel %vm87, 1, 0
    %v89 = vcvt.s32.f32 %v88
    %vm90 = vcmp.ge.s32.totalorder %v84, 16
    %vm91 = vcmp.lt.s32.totalorder %v84, 32
    %vm92 = vmand %vm90, %vm91
    %v93 = vsel %vm92, 1, 0
    %v94 = vcvt.s32.f32 %v93
    %v95 = vlaneseq
    %v96 = vshrl.u32 %v95, 7
    %v97 = vmul.u32 %v96, 8
    %vm98 = vcmp.eq.s32.totalorder %v84, %v97
    %v99 = vsel %vm98, 1, 0
    %v100 = vcvt.s32.f32 %v99
    %v101 = vld [vmem:[%s0] sm:$0xff]
    %v102 = vld [vmem:[%s0 + $0x8] sm:$0xff]
    %v103 = vld [vmem:[%s3] sm:$0x1]
    %v104 = vld [vmem:[%s4] sm:$0x1]
    %vm105 = vcmask 261120
    %v106 = vsel %vm105, %v101, 0.0
    %107 = vadd.xlane.f32.xlu0 %v106
    %v108 = vpop.xlane.xlu0 %107
    %v109 = vsel %vm105, %v102, 0.0
    %110 = vadd.xlane.f32.xlu0 %v109
    %v111 = vpop.xlane.xlu0 %110
    %v112 = vrcp.pop 32.0
    %v113 = vmul.f32 32.0, %v112
    %v114 = vsub.f32 1.0, %v113
    %v115 = vmul.f32 %v112, %v114
    %v116 = vadd.f32 %v112, %v115
    %vm117 = vweird.f32 %v112
    %v118 = vsel %vm117, %v112, %v116
    %v119 = vmul.f32 %v108, %v118
    %v120 = vmul.f32 %v111, %v118
    %v121 = vsub.f32 %v101, %v119
    %v122 = vsub.f32 %v102, %v120
    %v123 = vmul.f32 %v121, %v121
    %v124 = vmul.f32 %v122, %v122
    %v125 = vsel %vm105, %v123, 0.0
    %126 = vadd.xlane.f32.xlu0 %v125
    %v127 = vpop.xlane.xlu0 %126
    %v128 = vsel %vm105, %v124, 0.0
    %129 = vadd.xlane.f32.xlu0 %v128
    %v130 = vpop.xlane.xlu0 %129
    %v131 = vmul.f32 %v127, %v118
    %v132 = vmul.f32 %v130, %v118
    %v133 = vadd.f32 %v131, 1e-12
    %v134 = vadd.f32 %v132, 1e-12
    %v135 = vrsqrt.pop %v133
    %v136 = vmul.f32 %v135, %v133
    %v137 = vmul.f32 %v136, %v135
    %v138 = vmul.f32 0.5, %v137
    %v139 = vsub.f32 1.5, %v138
    %v140 = vmul.f32 %v135, %v139
    %vm141 = vweird.f32 %v133
    %vm142 = vweird.f32 %v135
    %vm143 = vmor %vm141, %vm142
    %v144 = vsel %vm143, %v135, %v140
    %v145 = vrsqrt.pop %v134
    %v146 = vmul.f32 %v145, %v134
    %v147 = vmul.f32 %v146, %v145
    %v148 = vmul.f32 0.5, %v147
    %v149 = vsub.f32 1.5, %v148
    %v150 = vmul.f32 %v145, %v149
    %vm151 = vweird.f32 %v134
    %vm152 = vweird.f32 %v145
    %vm153 = vmor %vm151, %vm152
    %v154 = vsel %vm153, %v145, %v150
    %v155 = vmul.f32 %v121, %v144
    %v156 = vmul.f32 %v122, %v154
    %v158 = vperm.slane %v103, 0
    %v160 = vmul.f32 %v155, %v158
    %v161 = vmul.f32 %v156, %v158
    %v163 = vperm.slane %v104, 0
    %v165 = vadd.f32 %v160, %v163
    %v166 = vadd.f32 %v161, %v163
    %v167 = vld [vmem:[%s5] sm:$0xff]
    %v168 = vld [vmem:[%s5 + $0x8] sm:$0xff]
    %v169 = vld [vmem:[%s5 + $0x10] sm:$0xff]
    %v170 = vld [vmem:[%s5 + $0x18] sm:$0xff]
    %v171 = vld [vmem:[%s6] sm:$0x1]
    %v173 = vperm.slane %v171, 0
    %v176 = vsel %vm105, %v165, 0
    %v179 = vsel %vm105, %v166, 0
    %181 = vmatpush.msra.mxu0 0.0
    %182 = vmatpush.msra.mxu0 0.0
    %183 = vmatpush.msra.mxu0 0.0
    %184 = vmatpush.msra.mxu0 0.0
    %185 = vmatpush.msra.mxu0 0.0
    %186 = vmatpush.msra.mxu0 0.0
    %187 = vmatpush.msra.mxu0 0.0
    %188 = vmatpush.msra.mxu0 0.0
    %189 = vmatpush.msra.mxu0 0.0
    %190 = vmatpush.msra.mxu0 0.0
    %191 = vmatpush.msra.mxu0 0.0
    %192 = vmatpush.msra.mxu0 0.0
    %193 = vmatpush.msra.mxu0 %v170
    %194 = vmatpush.msra.mxu0 %v169
    %195 = vmatpush.msra.mxu0 %v168
    %196 = vmatpush.msra.mxu0 %v167
    %197 = vmatmul.f32.gmra.mxu0 %v176
    %v198 = vpop.f32.mrf.mxu0
    %v199 = vadd.f32 %v173, %v198
    %200 = vmatmul.f32.gmra.mxu0 %v179
    %v201 = vpop.f32.mrf.mxu0
    %v202 = vadd.f32 %v173, %v201
    %203 = vdwg.mxu0
    %v204 = vld [vmem:[%s7] sm:$0xff]
    %v205 = vld [vmem:[%s7 + $0x8] sm:$0xff]
    %v206 = vld [vmem:[%s7 + $0x10] sm:$0xff]
    %v207 = vld [vmem:[%s7 + $0x18] sm:$0xff]
    %v208 = vld [vmem:[%s8] sm:$0x1]
    %v210 = vperm.slane %v208, 0
    %212 = vmatpush.msra.mxu0 0.0
    %213 = vmatpush.msra.mxu0 0.0
    %214 = vmatpush.msra.mxu0 0.0
    %215 = vmatpush.msra.mxu0 0.0
    %216 = vmatpush.msra.mxu0 0.0
    %217 = vmatpush.msra.mxu0 0.0
    %218 = vmatpush.msra.mxu0 0.0
    %219 = vmatpush.msra.mxu0 0.0
    %220 = vmatpush.msra.mxu0 0.0
    %221 = vmatpush.msra.mxu0 0.0
    %222 = vmatpush.msra.mxu0 0.0
    %223 = vmatpush.msra.mxu0 0.0
    %224 = vmatpush.msra.mxu0 %v207
    %225 = vmatpush.msra.mxu0 %v206
    %226 = vmatpush.msra.mxu0 %v205
    %227 = vmatpush.msra.mxu0 %v204
    %228 = vmatmul.f32.gmra.mxu0 %v176
    %v229 = vpop.f32.mrf.mxu0
    %v230 = vadd.f32 %v210, %v229
    %231 = vmatmul.f32.gmra.mxu0 %v179
    %v232 = vpop.f32.mrf.mxu0
    %v233 = vadd.f32 %v210, %v232
    %234 = vdwg.mxu0
    %v235 = vld [vmem:[%s9] sm:$0xff]
    %v236 = vld [vmem:[%s9 + $0x8] sm:$0xff]
    %v237 = vld [vmem:[%s9 + $0x10] sm:$0xff]
    %v238 = vld [vmem:[%s9 + $0x18] sm:$0xff]
    %v239 = vld [vmem:[%s10] sm:$0x1]
    %v241 = vperm.slane %v239, 0
    %243 = vmatpush.msra.mxu0 0.0
    %244 = vmatpush.msra.mxu0 0.0
    %245 = vmatpush.msra.mxu0 0.0
    %246 = vmatpush.msra.mxu0 0.0
    %247 = vmatpush.msra.mxu0 0.0
    %248 = vmatpush.msra.mxu0 0.0
    %249 = vmatpush.msra.mxu0 0.0
    %250 = vmatpush.msra.mxu0 0.0
    %251 = vmatpush.msra.mxu0 0.0
    %252 = vmatpush.msra.mxu0 0.0
    %253 = vmatpush.msra.mxu0 0.0
    %254 = vmatpush.msra.mxu0 0.0
    %255 = vmatpush.msra.mxu0 %v238
    %256 = vmatpush.msra.mxu0 %v237
    %257 = vmatpush.msra.mxu0 %v236
    %258 = vmatpush.msra.mxu0 %v235
    %259 = vmatmul.f32.gmra.mxu0 %v176
    %v260 = vpop.f32.mrf.mxu0
    %v261 = vadd.f32 %v241, %v260
    %262 = vmatmul.f32.gmra.mxu0 %v179
    %v263 = vpop.f32.mrf.mxu0
    %v264 = vadd.f32 %v241, %v263
    %265 = vdwg.mxu0
    %v266 = vmul.f32 %v230, %v89
    %v267 = vmul.f32 %v233, %v89
    %v268 = vmul.f32 %v261, %v89
    %v269 = vmul.f32 %v264, %v89
    %v271 = vsel %vm105, %v199, 0
    %v274 = vsel %vm105, %v202, 0
    %v277 = vsel %vm105, %v266, 0
    %v280 = vsel %vm105, %v267, 0
    %282 = vmatpush.xpose.msra.mxu0 0.0
    %283 = vmatpush.xpose.msra.mxu0 0.0
    %284 = vmatpush.xpose.msra.mxu0 0.0
    %285 = vmatpush.xpose.msra.mxu0 0.0
    %286 = vmatpush.xpose.msra.mxu0 0.0
    %287 = vmatpush.xpose.msra.mxu0 0.0
    %288 = vmatpush.xpose.msra.mxu0 0.0
    %289 = vmatpush.xpose.msra.mxu0 0.0
    %290 = vmatpush.xpose.msra.mxu0 0.0
    %291 = vmatpush.xpose.msra.mxu0 0.0
    %292 = vmatpush.xpose.msra.mxu0 0.0
    %293 = vmatpush.xpose.msra.mxu0 0.0
    %294 = vmatpush.xpose.msra.mxu0 0.0
    %295 = vmatpush.xpose.msra.mxu0 0.0
    %296 = vmatpush.xpose.msra.mxu0 %v280
    %297 = vmatpush.xpose.msra.mxu0 %v277
    %298 = vmatmul.f32.gmra.mxu0 %v271
    %v299 = vpop.f32.mrf.mxu0
    %v300 = vadd.f32 %v81, %v299
    %301 = vmatmul.f32.gmra.mxu0 %v274
    %v302 = vpop.f32.mrf.mxu0
    %v303 = vadd.f32 %v82, %v302
    %304 = vdwg.mxu0
    %vm305 = vcmask 130048
    %v306 = vsel %vm305, %v300, -inf
    %307 = vmax.xlane.f32.xlu0 %v306
    %v308 = vpop.xlane.xlu0 %307
    %v309 = vsel %vm305, %v303, -inf
    %310 = vmax.xlane.f32.xlu0 %v309
    %v311 = vpop.xlane.xlu0 %310
    %v312 = vsub.f32 %v300, %v308
    %v313 = vsub.f32 %v303, %v311
    %v314 = vmul.f32 %v312, 1.442695
    %v315 = vpow.pop %v314
    %v316 = vmul.f32 %v313, 1.442695
    %v317 = vpow.pop %v316
    %v318 = vsel %vm305, %v315, 0.0
    %319 = vadd.xlane.f32.xlu0 %v318
    %v320 = vpop.xlane.xlu0 %319
    %v321 = vsel %vm305, %v317, 0.0
    %322 = vadd.xlane.f32.xlu0 %v321
    %v323 = vpop.xlane.xlu0 %322
    %v324 = vrcp.pop %v320
    %v325 = vrcp.pop %v323
    %v326 = vmul.f32 %v315, %v324
    %v327 = vmul.f32 %v317, %v325
    %v328 = vmul.f32 %v230, %v94
    %v329 = vmul.f32 %v233, %v94
    %v330 = vmul.f32 %v261, %v94
    %v331 = vmul.f32 %v264, %v94
    %v333 = vsel %vm105, %v328, 0
    %v336 = vsel %vm105, %v329, 0
    %338 = vmatpush.xpose.msra.mxu0 0.0
    %339 = vmatpush.xpose.msra.mxu0 0.0
    %340 = vmatpush.xpose.msra.mxu0 0.0
    %341 = vmatpush.xpose.msra.mxu0 0.0
    %342 = vmatpush.xpose.msra.mxu0 0.0
    %343 = vmatpush.xpose.msra.mxu0 0.0
    %344 = vmatpush.xpose.msra.mxu0 0.0
    %345 = vmatpush.xpose.msra.mxu0 0.0
    %346 = vmatpush.xpose.msra.mxu0 0.0
    %347 = vmatpush.xpose.msra.mxu0 0.0
    %348 = vmatpush.xpose.msra.mxu0 0.0
    %349 = vmatpush.xpose.msra.mxu0 0.0
    %350 = vmatpush.xpose.msra.mxu0 0.0
    %351 = vmatpush.xpose.msra.mxu0 0.0
    %352 = vmatpush.xpose.msra.mxu0 %v336
    %353 = vmatpush.xpose.msra.mxu0 %v333
    %354 = vmatmul.f32.gmra.mxu0 %v271
    %v355 = vpop.f32.mrf.mxu0
    %v356 = vadd.f32 %v81, %v355
    %357 = vmatmul.f32.gmra.mxu0 %v274
    %v358 = vpop.f32.mrf.mxu0
    %v359 = vadd.f32 %v82, %v358
    %360 = vdwg.mxu0
    %v361 = vsel %vm305, %v356, -inf
    %362 = vmax.xlane.f32.xlu0 %v361
    %v363 = vpop.xlane.xlu0 %362
    %v364 = vsel %vm305, %v359, -inf
    %365 = vmax.xlane.f32.xlu0 %v364
    %v366 = vpop.xlane.xlu0 %365
    %v367 = vsub.f32 %v356, %v363
    %v368 = vsub.f32 %v359, %v366
    %v369 = vmul.f32 %v367, 1.442695
    %v370 = vpow.pop %v369
    %v371 = vmul.f32 %v368, 1.442695
    %v372 = vpow.pop %v371
    %v373 = vsel %vm305, %v370, 0.0
    %374 = vadd.xlane.f32.xlu0 %v373
    %v375 = vpop.xlane.xlu0 %374
    %v376 = vsel %vm305, %v372, 0.0
    %377 = vadd.xlane.f32.xlu0 %v376
    %v378 = vpop.xlane.xlu0 %377
    %v379 = vrcp.pop %v375
    %v380 = vrcp.pop %v378
    %v381 = vmul.f32 %v370, %v379
    %v382 = vmul.f32 %v372, %v380
    %v384 = vsel %vm305, %v381, 0
    %v387 = vsel %vm305, %v382, 0
    %389 = vmatpush.msra.mxu0 0.0
    %390 = vmatpush.msra.mxu0 0.0
    %391 = vmatpush.msra.mxu0 0.0
    %392 = vmatpush.msra.mxu0 0.0
    %393 = vmatpush.msra.mxu0 0.0
    %394 = vmatpush.msra.mxu0 0.0
    %395 = vmatpush.msra.mxu0 0.0
    %396 = vmatpush.msra.mxu0 0.0
    %397 = vmatpush.msra.mxu0 0.0
    %398 = vmatpush.msra.mxu0 0.0
    %399 = vmatpush.msra.mxu0 0.0
    %400 = vmatpush.msra.mxu0 0.0
    %401 = vmatpush.msra.mxu0 0.0
    %402 = vmatpush.msra.mxu0 0.0
    %403 = vmatpush.msra.mxu0 %v331
    %404 = vmatpush.msra.mxu0 %v330
    %405 = vmatmul.f32.gmra.mxu0 %v384
    %v406 = vpop.f32.mrf.mxu0
    %v407 = vadd.f32 0.0, %v406
    %408 = vmatmul.f32.gmra.mxu0 %v387
    %v409 = vpop.f32.mrf.mxu0
    %v410 = vadd.f32 0.0, %v409
    %411 = vdwg.mxu0
    %v413 = vsel %vm305, %v326, 0
    %v416 = vsel %vm305, %v327, 0
    %418 = vmatpush.msra.mxu0 0.0
    %419 = vmatpush.msra.mxu0 0.0
    %420 = vmatpush.msra.mxu0 0.0
    %421 = vmatpush.msra.mxu0 0.0
    %422 = vmatpush.msra.mxu0 0.0
    %423 = vmatpush.msra.mxu0 0.0
    %424 = vmatpush.msra.mxu0 0.0
    %425 = vmatpush.msra.mxu0 0.0
    %426 = vmatpush.msra.mxu0 0.0
    %427 = vmatpush.msra.mxu0 0.0
    %428 = vmatpush.msra.mxu0 0.0
    %429 = vmatpush.msra.mxu0 0.0
    %430 = vmatpush.msra.mxu0 0.0
    %431 = vmatpush.msra.mxu0 0.0
    %432 = vmatpush.msra.mxu0 %v269
    %433 = vmatpush.msra.mxu0 %v268
    %434 = vmatmul.f32.gmra.mxu0 %v413
    %v435 = vpop.f32.mrf.mxu0
    %v436 = vadd.f32 %v407, %v435
    %437 = vmatmul.f32.gmra.mxu0 %v416
    %v438 = vpop.f32.mrf.mxu0
    %v439 = vadd.f32 %v410, %v438
    %440 = vdwg.mxu0
    %v441 = vld [vmem:[%s11] sm:$0xff]
    %v442 = vld [vmem:[%s11 + $0x8] sm:$0xff]
    %v443 = vld [vmem:[%s11 + $0x10] sm:$0xff]
    %v444 = vld [vmem:[%s11 + $0x18] sm:$0xff]
    %v445 = vld [vmem:[%s12] sm:$0x1]
    %v447 = vperm.slane %v445, 0
    %v450 = vsel %vm105, %v436, 0
    %v453 = vsel %vm105, %v439, 0
    %455 = vmatpush.msra.mxu0 0.0
    %456 = vmatpush.msra.mxu0 0.0
    %457 = vmatpush.msra.mxu0 0.0
    %458 = vmatpush.msra.mxu0 0.0
    %459 = vmatpush.msra.mxu0 0.0
    %460 = vmatpush.msra.mxu0 0.0
    %461 = vmatpush.msra.mxu0 0.0
    %462 = vmatpush.msra.mxu0 0.0
    %463 = vmatpush.msra.mxu0 0.0
    %464 = vmatpush.msra.mxu0 0.0
    %465 = vmatpush.msra.mxu0 0.0
    %466 = vmatpush.msra.mxu0 0.0
    %467 = vmatpush.msra.mxu0 %v444
    %468 = vmatpush.msra.mxu0 %v443
    %469 = vmatpush.msra.mxu0 %v442
    %470 = vmatpush.msra.mxu0 %v441
    %471 = vmatmul.f32.gmra.mxu0 %v450
    %v472 = vpop.f32.mrf.mxu0
    %v473 = vadd.f32 %v447, %v472
    %474 = vmatmul.f32.gmra.mxu0 %v453
    %v475 = vpop.f32.mrf.mxu0
    %v476 = vadd.f32 %v447, %v475
    %477 = vdwg.mxu0
    %v478 = vadd.f32 %v473, %v165
    %v479 = vadd.f32 %v476, %v166
    %v480 = vld [vmem:[%s13] sm:$0x1]
    %v481 = vld [vmem:[%s14] sm:$0x1]
    %v482 = vsel %vm105, %v478, 0.0
    %483 = vadd.xlane.f32.xlu0 %v482
    %v484 = vpop.xlane.xlu0 %483
    %v485 = vsel %vm105, %v479, 0.0
    %486 = vadd.xlane.f32.xlu0 %v485
    %v487 = vpop.xlane.xlu0 %486
    %v488 = vmul.f32 %v484, %v118
    %v489 = vmul.f32 %v487, %v118
    %v490 = vsub.f32 %v478, %v488
    %v491 = vsub.f32 %v479, %v489
    %v492 = vmul.f32 %v490, %v490
    %v493 = vmul.f32 %v491, %v491
    %v494 = vsel %vm105, %v492, 0.0
    %495 = vadd.xlane.f32.xlu0 %v494
    %v496 = vpop.xlane.xlu0 %495
    %v497 = vsel %vm105, %v493, 0.0
    %498 = vadd.xlane.f32.xlu0 %v497
    %v499 = vpop.xlane.xlu0 %498
    %v500 = vmul.f32 %v496, %v118
    %v501 = vmul.f32 %v499, %v118
    %v502 = vadd.f32 %v500, 1e-12
    %v503 = vadd.f32 %v501, 1e-12
    %v504 = vrsqrt.pop %v502
    %v505 = vmul.f32 %v504, %v502
    %v506 = vmul.f32 %v505, %v504
    %v507 = vmul.f32 0.5, %v506
    %v508 = vsub.f32 1.5, %v507
    %v509 = vmul.f32 %v504, %v508
    %vm510 = vweird.f32 %v502
    %vm511 = vweird.f32 %v504
    %vm512 = vmor %vm510, %vm511
    %v513 = vsel %vm512, %v504, %v509
    %v514 = vrsqrt.pop %v503
    %v515 = vmul.f32 %v514, %v503
    %v516 = vmul.f32 %v515, %v514
    %v517 = vmul.f32 0.5, %v516
    %v518 = vsub.f32 1.5, %v517
    %v519 = vmul.f32 %v514, %v518
    %vm520 = vweird.f32 %v503
    %vm521 = vweird.f32 %v514
    %vm522 = vmor %vm520, %vm521
    %v523 = vsel %vm522, %v514, %v519
    %v524 = vmul.f32 %v490, %v513
    %v525 = vmul.f32 %v491, %v523
    %v527 = vperm.slane %v480, 0
    %v529 = vmul.f32 %v524, %v527
    %v530 = vmul.f32 %v525, %v527
    %v532 = vperm.slane %v481, 0
    %v534 = vadd.f32 %v529, %v532
    %v535 = vadd.f32 %v530, %v532
    %v536 = vld [vmem:[%s15] sm:$0xff]
    %v537 = vld [vmem:[%s15 + $0x8] sm:$0xff]
    %v538 = vld [vmem:[%s15 + $0x10] sm:$0xff]
    %v539 = vld [vmem:[%s15 + $0x18] sm:$0xff]
    %v540 = vld [vmem:[%s16] sm:$0x1]
    %v542 = vperm.slane %v540, 0
    %v545 = vsel %vm105, %v534, 0
    %v548 = vsel %vm105, %v535, 0
    %550 = vmatpush.msra.mxu0 0.0
    %551 = vmatpush.msra.mxu0 0.0
    %552 = vmatpush.msra.mxu0 0.0
    %553 = vmatpush.msra.mxu0 0.0
    %554 = vmatpush.msra.mxu0 0.0
    %555 = vmatpush.msra.mxu0 0.0
    %556 = vmatpush.msra.mxu0 0.0
    %557 = vmatpush.msra.mxu0 0.0
    %558 = vmatpush.msra.mxu0 0.0
    %559 = vmatpush.msra.mxu0 0.0
    %560 = vmatpush.msra.mxu0 0.0
    %561 = vmatpush.msra.mxu0 0.0
    %562 = vmatpush.msra.mxu0 %v539
    %563 = vmatpush.msra.mxu0 %v538
    %564 = vmatpush.msra.mxu0 %v537
    %565 = vmatpush.msra.mxu0 %v536
    %566 = vmatmul.f32.gmra.mxu0 %v545
    %v567 = vpop.f32.mrf.mxu0
    %v568 = vadd.f32 %v542, %v567
    %569 = vmatmul.f32.gmra.mxu0 %v548
    %v570 = vpop.f32.mrf.mxu0
    %v571 = vadd.f32 %v542, %v570
    %572 = vdwg.mxu0
    %v573 = vmul.f32 %v568, 0.5
    %v574 = vmul.f32 %v571, 0.5
    %v575 = vmul.f32 %v568, 0.044715
    %v576 = vmul.f32 %v571, 0.044715
    %v577 = vmul.f32 %v575, %v568
    %v578 = vmul.f32 %v576, %v571
    %v579 = vmul.f32 %v577, %v568
    %v580 = vmul.f32 %v578, %v571
    %v581 = vadd.f32 %v568, %v579
    %v582 = vadd.f32 %v571, %v580
    %v583 = vmul.f32 %v581, 0.7978846
    %v584 = vmul.f32 %v582, 0.7978846
    %v585 = vtanh.pop %v583
    %v586 = vtanh.pop %v584
    %v587 = vadd.f32 %v585, 1.0
    %v588 = vadd.f32 %v586, 1.0
    %v589 = vmul.f32 %v573, %v587
    %v590 = vmul.f32 %v574, %v588
    %v591 = vld [vmem:[%s17] sm:$0xff]
    %v592 = vld [vmem:[%s17 + $0x8] sm:$0xff]
    %v593 = vld [vmem:[%s17 + $0x10] sm:$0xff]
    %v594 = vld [vmem:[%s17 + $0x18] sm:$0xff]
    %v595 = vld [vmem:[%s17 + $0x20] sm:$0xff]
    %v596 = vld [vmem:[%s17 + $0x28] sm:$0xff]
    %v597 = vld [vmem:[%s17 + $0x30] sm:$0xff]
    %v598 = vld [vmem:[%s17 + $0x38] sm:$0xff]
    %v599 = vld [vmem:[%s18] sm:$0x1]
    %v601 = vperm.slane %v599, 0
    %vm603 = vcmask 523264
    %v605 = vsel %vm603, %v589, 0
    %v608 = vsel %vm603, %v590, 0
    %610 = vmatpush.msra.mxu0 0.0
    %611 = vmatpush.msra.mxu0 0.0
    %612 = vmatpush.msra.mxu0 0.0
    %613 = vmatpush.msra.mxu0 0.0
    %614 = vmatpush.msra.mxu0 0.0
    %615 = vmatpush.msra.mxu0 0.0
    %616 = vmatpush.msra.mxu0 0.0
    %617 = vmatpush.msra.mxu0 0.0
    %618 = vmatpush.msra.mxu0 %v598
    %619 = vmatpush.msra.mxu0 %v597
    %620 = vmatpush.msra.mxu0 %v596
    %621 = vmatpush.msra.mxu0 %v595
    %622 = vmatpush.msra.mxu0 %v594
    %623 = vmatpush.msra.mxu0 %v593
    %624 = vmatpush.msra.mxu0 %v592
    %625 = vmatpush.msra.mxu0 %v591
    %626 = vmatmul.f32.gmra.mxu0 %v605
    %v627 = vpop.f32.mrf.mxu0
    %v628 = vadd.f32 %v601, %v627
    %629 = vmatmul.f32.gmra.mxu0 %v608
    %v630 = vpop.f32.mrf.mxu0
    %v631 = vadd.f32 %v601, %v630
    %632 = vdwg.mxu0
    %v633 = vadd.f32 %v628, %v534
    %v634 = vadd.f32 %v631, %v535
    %v635 = vld [vmem:[%s19] sm:$0x1]
    %v636 = vld [vmem:[%s20] sm:$0x1]
    %v637 = vsel %vm105, %v633, 0.0
    %638 = vadd.xlane.f32.xlu0 %v637
    %v639 = vpop.xlane.xlu0 %638
    %v640 = vsel %vm105, %v634, 0.0
    %641 = vadd.xlane.f32.xlu0 %v640
    %v642 = vpop.xlane.xlu0 %641
    %v643 = vmul.f32 %v639, %v118
    %v644 = vmul.f32 %v642, %v118
    %v645 = vsub.f32 %v633, %v643
    %v646 = vsub.f32 %v634, %v644
    %v647 = vmul.f32 %v645, %v645
    %v648 = vmul.f32 %v646, %v646
    %v649 = vsel %vm105, %v647, 0.0
    %650 = vadd.xlane.f32.xlu0 %v649
    %v651 = vpop.xlane.xlu0 %650
    %v652 = vsel %vm105, %v648, 0.0
    %653 = vadd.xlane.f32.xlu0 %v652
    %v654 = vpop.xlane.xlu0 %653
    %v655 = vmul.f32 %v651, %v118
    %v656 = vmul.f32 %v654, %v118
    %v657 = vadd.f32 %v655, 1e-12
    %v658 = vadd.f32 %v656, 1e-12
    %v659 = vrsqrt.pop %v657
    %v660 = vmul.f32 %v659, %v657
    %v661 = vmul.f32 %v660, %v659
    %v662 = vmul.f32 0.5, %v661
    %v663 = vsub.f32 1.5, %v662
    %v664 = vmul.f32 %v659, %v663
    %vm665 = vweird.f32 %v657
    %vm666 = vweird.f32 %v659
    %vm667 = vmor %vm665, %vm666
    %v668 = vsel %vm667, %v659, %v664
    %v669 = vrsqrt.pop %v658
    %v670 = vmul.f32 %v669, %v658
    %v671 = vmul.f32 %v670, %v669
    %v672 = vmul.f32 0.5, %v671
    %v673 = vsub.f32 1.5, %v672
    %v674 = vmul.f32 %v669, %v673
    %vm675 = vweird.f32 %v658
    %vm676 = vweird.f32 %v669
    %vm677 = vmor %vm675, %vm676
    %v678 = vsel %vm677, %v669, %v674
    %v679 = vmul.f32 %v645, %v668
    %v680 = vmul.f32 %v646, %v678
    %v682 = vperm.slane %v635, 0
    %v684 = vmul.f32 %v679, %v682
    %v685 = vmul.f32 %v680, %v682
    %v687 = vperm.slane %v636, 0
    %v689 = vadd.f32 %v684, %v687
    %v690 = vadd.f32 %v685, %v687
    %s691 = scalar_lea.vmem %s5, 32
    %v692 = vld [vmem:[%s691] sm:$0xff]
    %v693 = vld [vmem:[%s691 + $0x8] sm:$0xff]
    %v694 = vld [vmem:[%s691 + $0x10] sm:$0xff]
    %v695 = vld [vmem:[%s691 + $0x18] sm:$0xff]
    %s696 = scalar_lea.vmem %s6, 1
    %v697 = vld [vmem:[%s696] sm:$0x1]
    %v699 = vperm.slane %v697, 0
    %v702 = vsel %vm105, %v689, 0
    %v705 = vsel %vm105, %v690, 0
    %707 = vmatpush.msra.mxu0 0.0
    %708 = vmatpush.msra.mxu0 0.0
    %709 = vmatpush.msra.mxu0 0.0
    %710 = vmatpush.msra.mxu0 0.0
    %711 = vmatpush.msra.mxu0 0.0
    %712 = vmatpush.msra.mxu0 0.0
    %713 = vmatpush.msra.mxu0 0.0
    %714 = vmatpush.msra.mxu0 0.0
    %715 = vmatpush.msra.mxu0 0.0
    %716 = vmatpush.msra.mxu0 0.0
    %717 = vmatpush.msra.mxu0 0.0
    %718 = vmatpush.msra.mxu0 0.0
    %719 = vmatpush.msra.mxu0 %v695
    %720 = vmatpush.msra.mxu0 %v694
    %721 = vmatpush.msra.mxu0 %v693
    %722 = vmatpush.msra.mxu0 %v692
    %723 = vmatmul.f32.gmra.mxu0 %v702
    %v724 = vpop.f32.mrf.mxu0
    %v725 = vadd.f32 %v699, %v724
    %726 = vmatmul.f32.gmra.mxu0 %v705
    %v727 = vpop.f32.mrf.mxu0
    %v728 = vadd.f32 %v699, %v727
    %729 = vdwg.mxu0
    %s730 = scalar_lea.vmem %s7, 32
    %v731 = vld [vmem:[%s730] sm:$0xff]
    %v732 = vld [vmem:[%s730 + $0x8] sm:$0xff]
    %v733 = vld [vmem:[%s730 + $0x10] sm:$0xff]
    %v734 = vld [vmem:[%s730 + $0x18] sm:$0xff]
    %s735 = scalar_lea.vmem %s8, 1
    %v736 = vld [vmem:[%s735] sm:$0x1]
    %v738 = vperm.slane %v736, 0
    %740 = vmatpush.msra.mxu0 0.0
    %741 = vmatpush.msra.mxu0 0.0
    %742 = vmatpush.msra.mxu0 0.0
    %743 = vmatpush.msra.mxu0 0.0
    %744 = vmatpush.msra.mxu0 0.0
    %745 = vmatpush.msra.mxu0 0.0
    %746 = vmatpush.msra.mxu0 0.0
    %747 = vmatpush.msra.mxu0 0.0
    %748 = vmatpush.msra.mxu0 0.0
    %749 = vmatpush.msra.mxu0 0.0
    %750 = vmatpush.msra.mxu0 0.0
    %751 = vmatpush.msra.mxu0 0.0
    %752 = vmatpush.msra.mxu0 %v734
    %753 = vmatpush.msra.mxu0 %v733
    %754 = vmatpush.msra.mxu0 %v732
    %755 = vmatpush.msra.mxu0 %v731
    %756 = vmatmul.f32.gmra.mxu0 %v702
    %v757 = vpop.f32.mrf.mxu0
    %v758 = vadd.f32 %v738, %v757
    %759 = vmatmul.f32.gmra.mxu0 %v705
    %v760 = vpop.f32.mrf.mxu0
    %v761 = vadd.f32 %v738, %v760
    %762 = vdwg.mxu0
    %s763 = scalar_lea.vmem %s9, 32
    %v764 = vld [vmem:[%s763] sm:$0xff]
    %v765 = vld [vmem:[%s763 + $0x8] sm:$0xff]
    %v766 = vld [vmem:[%s763 + $0x10] sm:$0xff]
    %v767 = vld [vmem:[%s763 + $0x18] sm:$0xff]
    %s768 = scalar_lea.vmem %s10, 1
    %v769 = vld [vmem:[%s768] sm:$0x1]
    %v771 = vperm.slane %v769, 0
    %773 = vmatpush.msra.mxu0 0.0
    %774 = vmatpush.msra.mxu0 0.0
    %775 = vmatpush.msra.mxu0 0.0
    %776 = vmatpush.msra.mxu0 0.0
    %777 = vmatpush.msra.mxu0 0.0
    %778 = vmatpush.msra.mxu0 0.0
    %779 = vmatpush.msra.mxu0 0.0
    %780 = vmatpush.msra.mxu0 0.0
    %781 = vmatpush.msra.mxu0 0.0
    %782 = vmatpush.msra.mxu0 0.0
    %783 = vmatpush.msra.mxu0 0.0
    %784 = vmatpush.msra.mxu0 0.0
    %785 = vmatpush.msra.mxu0 %v767
    %786 = vmatpush.msra.mxu0 %v766
    %787 = vmatpush.msra.mxu0 %v765
    %788 = vmatpush.msra.mxu0 %v764
    %789 = vmatmul.f32.gmra.mxu0 %v702
    %v790 = vpop.f32.mrf.mxu0
    %v791 = vadd.f32 %v771, %v790
    %792 = vmatmul.f32.gmra.mxu0 %v705
    %v793 = vpop.f32.mrf.mxu0
    %v794 = vadd.f32 %v771, %v793
    %795 = vdwg.mxu0
    %v796 = vmul.f32 %v758, %v89
    %v797 = vmul.f32 %v761, %v89
    %v798 = vmul.f32 %v791, %v89
    %v799 = vmul.f32 %v794, %v89
    %v801 = vsel %vm105, %v725, 0
    %v804 = vsel %vm105, %v728, 0
    %v807 = vsel %vm105, %v796, 0
    %v810 = vsel %vm105, %v797, 0
    %812 = vmatpush.xpose.msra.mxu0 0.0
    %813 = vmatpush.xpose.msra.mxu0 0.0
    %814 = vmatpush.xpose.msra.mxu0 0.0
    %815 = vmatpush.xpose.msra.mxu0 0.0
    %816 = vmatpush.xpose.msra.mxu0 0.0
    %817 = vmatpush.xpose.msra.mxu0 0.0
    %818 = vmatpush.xpose.msra.mxu0 0.0
    %819 = vmatpush.xpose.msra.mxu0 0.0
    %820 = vmatpush.xpose.msra.mxu0 0.0
    %821 = vmatpush.xpose.msra.mxu0 0.0
    %822 = vmatpush.xpose.msra.mxu0 0.0
    %823 = vmatpush.xpose.msra.mxu0 0.0
    %824 = vmatpush.xpose.msra.mxu0 0.0
    %825 = vmatpush.xpose.msra.mxu0 0.0
    %826 = vmatpush.xpose.msra.mxu0 %v810
    %827 = vmatpush.xpose.msra.mxu0 %v807
    %828 = vmatmul.f32.gmra.mxu0 %v801
    %v829 = vpop.f32.mrf.mxu0
    %v830 = vadd.f32 %v81, %v829
    %831 = vmatmul.f32.gmra.mxu0 %v804
    %v832 = vpop.f32.mrf.mxu0
    %v833 = vadd.f32 %v82, %v832
    %834 = vdwg.mxu0
    %v835 = vsel %vm305, %v830, -inf
    %836 = vmax.xlane.f32.xlu0 %v835
    %v837 = vpop.xlane.xlu0 %836
    %v838 = vsel %vm305, %v833, -inf
    %839 = vmax.xlane.f32.xlu0 %v838
    %v840 = vpop.xlane.xlu0 %839
    %v841 = vsub.f32 %v830, %v837
    %v842 = vsub.f32 %v833, %v840
    %v843 = vmul.f32 %v841, 1.442695
    %v844 = vpow.pop %v843
    %v845 = vmul.f32 %v842, 1.442695
    %v846 = vpow.pop %v845
    %v847 = vsel %vm305, %v844, 0.0
    %848 = vadd.xlane.f32.xlu0 %v847
    %v849 = vpop.xlane.xlu0 %848
    %v850 = vsel %vm305, %v846, 0.0
    %851 = vadd.xlane.f32.xlu0 %v850
    %v852 = vpop.xlane.xlu0 %851
    %v853 = vrcp.pop %v849
    %v854 = vrcp.pop %v852
    %v855 = vmul.f32 %v844, %v853
    %v856 = vmul.f32 %v846, %v854
    %v857 = vmul.f32 %v758, %v94
    %v858 = vmul.f32 %v761, %v94
    %v859 = vmul.f32 %v791, %v94
    %v860 = vmul.f32 %v794, %v94
    %v862 = vsel %vm105, %v857, 0
    %v865 = vsel %vm105, %v858, 0
    %867 = vmatpush.xpose.msra.mxu0 0.0
    %868 = vmatpush.xpose.msra.mxu0 0.0
    %869 = vmatpush.xpose.msra.mxu0 0.0
    %870 = vmatpush.xpose.msra.mxu0 0.0
    %871 = vmatpush.xpose.msra.mxu0 0.0
    %872 = vmatpush.xpose.msra.mxu0 0.0
    %873 = vmatpush.xpose.msra.mxu0 0.0
    %874 = vmatpush.xpose.msra.mxu0 0.0
    %875 = vmatpush.xpose.msra.mxu0 0.0
    %876 = vmatpush.xpose.msra.mxu0 0.0
    %877 = vmatpush.xpose.msra.mxu0 0.0
    %878 = vmatpush.xpose.msra.mxu0 0.0
    %879 = vmatpush.xpose.msra.mxu0 0.0
    %880 = vmatpush.xpose.msra.mxu0 0.0
    %881 = vmatpush.xpose.msra.mxu0 %v865
    %882 = vmatpush.xpose.msra.mxu0 %v862
    %883 = vmatmul.f32.gmra.mxu0 %v801
    %v884 = vpop.f32.mrf.mxu0
    %v885 = vadd.f32 %v81, %v884
    %886 = vmatmul.f32.gmra.mxu0 %v804
    %v887 = vpop.f32.mrf.mxu0
    %v888 = vadd.f32 %v82, %v887
    %889 = vdwg.mxu0
    %v890 = vsel %vm305, %v885, -inf
    %891 = vmax.xlane.f32.xlu0 %v890
    %v892 = vpop.xlane.xlu0 %891
    %v893 = vsel %vm305, %v888, -inf
    %894 = vmax.xlane.f32.xlu0 %v893
    %v895 = vpop.xlane.xlu0 %894
    %v896 = vsub.f32 %v885, %v892
    %v897 = vsub.f32 %v888, %v895
    %v898 = vmul.f32 %v896, 1.442695
    %v899 = vpow.pop %v898
    %v900 = vmul.f32 %v897, 1.442695
    %v901 = vpow.pop %v900
    %v902 = vsel %vm305, %v899, 0.0
    %903 = vadd.xlane.f32.xlu0 %v902
    %v904 = vpop.xlane.xlu0 %903
    %v905 = vsel %vm305, %v901, 0.0
    %906 = vadd.xlane.f32.xlu0 %v905
    %v907 = vpop.xlane.xlu0 %906
    %v908 = vrcp.pop %v904
    %v909 = vrcp.pop %v907
    %v910 = vmul.f32 %v899, %v908
    %v911 = vmul.f32 %v901, %v909
    %v913 = vsel %vm305, %v910, 0
    %v916 = vsel %vm305, %v911, 0
    %918 = vmatpush.msra.mxu0 0.0
    %919 = vmatpush.msra.mxu0 0.0
    %920 = vmatpush.msra.mxu0 0.0
    %921 = vmatpush.msra.mxu0 0.0
    %922 = vmatpush.msra.mxu0 0.0
    %923 = vmatpush.msra.mxu0 0.0
    %924 = vmatpush.msra.mxu0 0.0
    %925 = vmatpush.msra.mxu0 0.0
    %926 = vmatpush.msra.mxu0 0.0
    %927 = vmatpush.msra.mxu0 0.0
    %928 = vmatpush.msra.mxu0 0.0
    %929 = vmatpush.msra.mxu0 0.0
    %930 = vmatpush.msra.mxu0 0.0
    %931 = vmatpush.msra.mxu0 0.0
    %932 = vmatpush.msra.mxu0 %v860
    %933 = vmatpush.msra.mxu0 %v859
    %934 = vmatmul.f32.gmra.mxu0 %v913
    %v935 = vpop.f32.mrf.mxu0
    %v936 = vadd.f32 0.0, %v935
    %937 = vmatmul.f32.gmra.mxu0 %v916
    %v938 = vpop.f32.mrf.mxu0
    %v939 = vadd.f32 0.0, %v938
    %940 = vdwg.mxu0
    %v942 = vsel %vm305, %v855, 0
    %v945 = vsel %vm305, %v856, 0
    %947 = vmatpush.msra.mxu0 0.0
    %948 = vmatpush.msra.mxu0 0.0
    %949 = vmatpush.msra.mxu0 0.0
    %950 = vmatpush.msra.mxu0 0.0
    %951 = vmatpush.msra.mxu0 0.0
    %952 = vmatpush.msra.mxu0 0.0
    %953 = vmatpush.msra.mxu0 0.0
    %954 = vmatpush.msra.mxu0 0.0
    %955 = vmatpush.msra.mxu0 0.0
    %956 = vmatpush.msra.mxu0 0.0
    %957 = vmatpush.msra.mxu0 0.0
    %958 = vmatpush.msra.mxu0 0.0
    %959 = vmatpush.msra.mxu0 0.0
    %960 = vmatpush.msra.mxu0 0.0
    %961 = vmatpush.msra.mxu0 %v799
    %962 = vmatpush.msra.mxu0 %v798
    %963 = vmatmul.f32.gmra.mxu0 %v942
    %v964 = vpop.f32.mrf.mxu0
    %v965 = vadd.f32 %v936, %v964
    %966 = vmatmul.f32.gmra.mxu0 %v945
    %v967 = vpop.f32.mrf.mxu0
    %v968 = vadd.f32 %v939, %v967
    %969 = vdwg.mxu0
    %s970 = scalar_lea.vmem %s11, 32
    %v971 = vld [vmem:[%s970] sm:$0xff]
    %v972 = vld [vmem:[%s970 + $0x8] sm:$0xff]
    %v973 = vld [vmem:[%s970 + $0x10] sm:$0xff]
    %v974 = vld [vmem:[%s970 + $0x18] sm:$0xff]
    %s975 = scalar_lea.vmem %s12, 1
    %v976 = vld [vmem:[%s975] sm:$0x1]
    %v978 = vperm.slane %v976, 0
    %v981 = vsel %vm105, %v965, 0
    %v984 = vsel %vm105, %v968, 0
    %986 = vmatpush.msra.mxu0 0.0
    %987 = vmatpush.msra.mxu0 0.0
    %988 = vmatpush.msra.mxu0 0.0
    %989 = vmatpush.msra.mxu0 0.0
    %990 = vmatpush.msra.mxu0 0.0
    %991 = vmatpush.msra.mxu0 0.0
    %992 = vmatpush.msra.mxu0 0.0
    %993 = vmatpush.msra.mxu0 0.0
    %994 = vmatpush.msra.mxu0 0.0
    %995 = vmatpush.msra.mxu0 0.0
    %996 = vmatpush.msra.mxu0 0.0
    %997 = vmatpush.msra.mxu0 0.0
    %998 = vmatpush.msra.mxu0 %v974
    %999 = vmatpush.msra.mxu0 %v973
    %1000 = vmatpush.msra.mxu0 %v972
    %1001 = vmatpush.msra.mxu0 %v971
    %1002 = vmatmul.f32.gmra.mxu0 %v981
    %v1003 = vpop.f32.mrf.mxu0
    %v1004 = vadd.f32 %v978, %v1003
    %1005 = vmatmul.f32.gmra.mxu0 %v984
    %v1006 = vpop.f32.mrf.mxu0
    %v1007 = vadd.f32 %v978, %v1006
    %1008 = vdwg.mxu0
    %v1009 = vadd.f32 %v1004, %v689
    %v1010 = vadd.f32 %v1007, %v690
    %s1011 = scalar_lea.vmem %s13, 1
    %v1012 = vld [vmem:[%s1011] sm:$0x1]
    %s1013 = scalar_lea.vmem %s14, 1
    %v1014 = vld [vmem:[%s1013] sm:$0x1]
    %v1015 = vsel %vm105, %v1009, 0.0
    %1016 = vadd.xlane.f32.xlu0 %v1015
    %v1017 = vpop.xlane.xlu0 %1016
    %v1018 = vsel %vm105, %v1010, 0.0
    %1019 = vadd.xlane.f32.xlu0 %v1018
    %v1020 = vpop.xlane.xlu0 %1019
    %v1021 = vmul.f32 %v1017, %v118
    %v1022 = vmul.f32 %v1020, %v118
    %v1023 = vsub.f32 %v1009, %v1021
    %v1024 = vsub.f32 %v1010, %v1022
    %v1025 = vmul.f32 %v1023, %v1023
    %v1026 = vmul.f32 %v1024, %v1024
    %v1027 = vsel %vm105, %v1025, 0.0
    %1028 = vadd.xlane.f32.xlu0 %v1027
    %v1029 = vpop.xlane.xlu0 %1028
    %v1030 = vsel %vm105, %v1026, 0.0
    %1031 = vadd.xlane.f32.xlu0 %v1030
    %v1032 = vpop.xlane.xlu0 %1031
    %v1033 = vmul.f32 %v1029, %v118
    %v1034 = vmul.f32 %v1032, %v118
    %v1035 = vadd.f32 %v1033, 1e-12
    %v1036 = vadd.f32 %v1034, 1e-12
    %v1037 = vrsqrt.pop %v1035
    %v1038 = vmul.f32 %v1037, %v1035
    %v1039 = vmul.f32 %v1038, %v1037
    %v1040 = vmul.f32 0.5, %v1039
    %v1041 = vsub.f32 1.5, %v1040
    %v1042 = vmul.f32 %v1037, %v1041
    %vm1043 = vweird.f32 %v1035
    %vm1044 = vweird.f32 %v1037
    %vm1045 = vmor %vm1043, %vm1044
    %v1046 = vsel %vm1045, %v1037, %v1042
    %v1047 = vrsqrt.pop %v1036
    %v1048 = vmul.f32 %v1047, %v1036
    %v1049 = vmul.f32 %v1048, %v1047
    %v1050 = vmul.f32 0.5, %v1049
    %v1051 = vsub.f32 1.5, %v1050
    %v1052 = vmul.f32 %v1047, %v1051
    %vm1053 = vweird.f32 %v1036
    %vm1054 = vweird.f32 %v1047
    %vm1055 = vmor %vm1053, %vm1054
    %v1056 = vsel %vm1055, %v1047, %v1052
    %v1057 = vmul.f32 %v1023, %v1046
    %v1058 = vmul.f32 %v1024, %v1056
    %v1060 = vperm.slane %v1012, 0
    %v1062 = vmul.f32 %v1057, %v1060
    %v1063 = vmul.f32 %v1058, %v1060
    %v1065 = vperm.slane %v1014, 0
    %v1067 = vadd.f32 %v1062, %v1065
    %v1068 = vadd.f32 %v1063, %v1065
    %s1069 = scalar_lea.vmem %s15, 32
    %v1070 = vld [vmem:[%s1069] sm:$0xff]
    %v1071 = vld [vmem:[%s1069 + $0x8] sm:$0xff]
    %v1072 = vld [vmem:[%s1069 + $0x10] sm:$0xff]
    %v1073 = vld [vmem:[%s1069 + $0x18] sm:$0xff]
    %s1074 = scalar_lea.vmem %s16, 1
    %v1075 = vld [vmem:[%s1074] sm:$0x1]
    %v1077 = vperm.slane %v1075, 0
    %v1080 = vsel %vm105, %v1067, 0
    %v1083 = vsel %vm105, %v1068, 0
    %1085 = vmatpush.msra.mxu0 0.0
    %1086 = vmatpush.msra.mxu0 0.0
    %1087 = vmatpush.msra.mxu0 0.0
    %1088 = vmatpush.msra.mxu0 0.0
    %1089 = vmatpush.msra.mxu0 0.0
    %1090 = vmatpush.msra.mxu0 0.0
    %1091 = vmatpush.msra.mxu0 0.0
    %1092 = vmatpush.msra.mxu0 0.0
    %1093 = vmatpush.msra.mxu0 0.0
    %1094 = vmatpush.msra.mxu0 0.0
    %1095 = vmatpush.msra.mxu0 0.0
    %1096 = vmatpush.msra.mxu0 0.0
    %1097 = vmatpush.msra.mxu0 %v1073
    %1098 = vmatpush.msra.mxu0 %v1072
    %1099 = vmatpush.msra.mxu0 %v1071
    %1100 = vmatpush.msra.mxu0 %v1070
    %1101 = vmatmul.f32.gmra.mxu0 %v1080
    %v1102 = vpop.f32.mrf.mxu0
    %v1103 = vadd.f32 %v1077, %v1102
    %1104 = vmatmul.f32.gmra.mxu0 %v1083
    %v1105 = vpop.f32.mrf.mxu0
    %v1106 = vadd.f32 %v1077, %v1105
    %1107 = vdwg.mxu0
    %v1108 = vmul.f32 %v1103, 0.5
    %v1109 = vmul.f32 %v1106, 0.5
    %v1110 = vmul.f32 %v1103, 0.044715
    %v1111 = vmul.f32 %v1106, 0.044715
    %v1112 = vmul.f32 %v1110, %v1103
    %v1113 = vmul.f32 %v1111, %v1106
    %v1114 = vmul.f32 %v1112, %v1103
    %v1115 = vmul.f32 %v1113, %v1106
    %v1116 = vadd.f32 %v1103, %v1114
    %v1117 = vadd.f32 %v1106, %v1115
    %v1118 = vmul.f32 %v1116, 0.7978846
    %v1119 = vmul.f32 %v1117, 0.7978846
    %v1120 = vtanh.pop %v1118
    %v1121 = vtanh.pop %v1119
    %v1122 = vadd.f32 %v1120, 1.0
    %v1123 = vadd.f32 %v1121, 1.0
    %v1124 = vmul.f32 %v1108, %v1122
    %v1125 = vmul.f32 %v1109, %v1123
    %s1126 = scalar_lea.vmem %s17, 64
    %v1127 = vld [vmem:[%s1126] sm:$0xff]
    %v1128 = vld [vmem:[%s1126 + $0x8] sm:$0xff]
    %v1129 = vld [vmem:[%s1126 + $0x10] sm:$0xff]
    %v1130 = vld [vmem:[%s1126 + $0x18] sm:$0xff]
    %v1131 = vld [vmem:[%s1126 + $0x20] sm:$0xff]
    %v1132 = vld [vmem:[%s1126 + $0x28] sm:$0xff]
    %v1133 = vld [vmem:[%s1126 + $0x30] sm:$0xff]
    %v1134 = vld [vmem:[%s1126 + $0x38] sm:$0xff]
    %s1135 = scalar_lea.vmem %s18, 1
    %v1136 = vld [vmem:[%s1135] sm:$0x1]
    %v1138 = vperm.slane %v1136, 0
    %v1141 = vsel %vm603, %v1124, 0
    %v1144 = vsel %vm603, %v1125, 0
    %1146 = vmatpush.msra.mxu0 0.0
    %1147 = vmatpush.msra.mxu0 0.0
    %1148 = vmatpush.msra.mxu0 0.0
    %1149 = vmatpush.msra.mxu0 0.0
    %1150 = vmatpush.msra.mxu0 0.0
    %1151 = vmatpush.msra.mxu0 0.0
    %1152 = vmatpush.msra.mxu0 0.0
    %1153 = vmatpush.msra.mxu0 0.0
    %1154 = vmatpush.msra.mxu0 %v1134
    %1155 = vmatpush.msra.mxu0 %v1133
    %1156 = vmatpush.msra.mxu0 %v1132
    %1157 = vmatpush.msra.mxu0 %v1131
    %1158 = vmatpush.msra.mxu0 %v1130
    %1159 = vmatpush.msra.mxu0 %v1129
    %1160 = vmatpush.msra.mxu0 %v1128
    %1161 = vmatpush.msra.mxu0 %v1127
    %1162 = vmatmul.f32.gmra.mxu0 %v1141
    %v1163 = vpop.f32.mrf.mxu0
    %v1164 = vadd.f32 %v1138, %v1163
    %1165 = vmatmul.f32.gmra.mxu0 %v1144
    %v1166 = vpop.f32.mrf.mxu0
    %v1167 = vadd.f32 %v1138, %v1166
    %1168 = vdwg.mxu0
    %v1169 = vadd.f32 %v1164, %v1067
    %v1170 = vadd.f32 %v1167, %v1068
    %s1171 = scalar_lea.vmem %s19, 1
    %v1172 = vld [vmem:[%s1171] sm:$0x1]
    %s1173 = scalar_lea.vmem %s20, 1
    %v1174 = vld [vmem:[%s1173] sm:$0x1]
    %v1175 = vsel %vm105, %v1169, 0.0
    %1176 = vadd.xlane.f32.xlu0 %v1175
    %v1177 = vpop.xlane.xlu0 %1176
    %v1178 = vsel %vm105, %v1170, 0.0
    %1179 = vadd.xlane.f32.xlu0 %v1178
    %v1180 = vpop.xlane.xlu0 %1179
    %v1181 = vmul.f32 %v1177, %v118
    %v1182 = vmul.f32 %v1180, %v118
    %v1183 = vsub.f32 %v1169, %v1181
    %v1184 = vsub.f32 %v1170, %v1182
    %v1185 = vmul.f32 %v1183, %v1183
    %v1186 = vmul.f32 %v1184, %v1184
    %v1187 = vsel %vm105, %v1185, 0.0
    %1188 = vadd.xlane.f32.xlu0 %v1187
    %v1189 = vpop.xlane.xlu0 %1188
    %v1190 = vsel %vm105, %v1186, 0.0
    %1191 = vadd.xlane.f32.xlu0 %v1190
    %v1192 = vpop.xlane.xlu0 %1191
    %v1193 = vmul.f32 %v1189, %v118
    %v1194 = vmul.f32 %v1192, %v118
    %v1195 = vadd.f32 %v1193, 1e-12
    %v1196 = vadd.f32 %v1194, 1e-12
    %v1197 = vrsqrt.pop %v1195
    %v1198 = vmul.f32 %v1197, %v1195
    %v1199 = vmul.f32 %v1198, %v1197
    %v1200 = vmul.f32 0.5, %v1199
    %v1201 = vsub.f32 1.5, %v1200
    %v1202 = vmul.f32 %v1197, %v1201
    %vm1203 = vweird.f32 %v1195
    %vm1204 = vweird.f32 %v1197
    %vm1205 = vmor %vm1203, %vm1204
    %v1206 = vsel %vm1205, %v1197, %v1202
    %v1207 = vrsqrt.pop %v1196
    %v1208 = vmul.f32 %v1207, %v1196
    %v1209 = vmul.f32 %v1208, %v1207
    %v1210 = vmul.f32 0.5, %v1209
    %v1211 = vsub.f32 1.5, %v1210
    %v1212 = vmul.f32 %v1207, %v1211
    %vm1213 = vweird.f32 %v1196
    %vm1214 = vweird.f32 %v1207
    %vm1215 = vmor %vm1213, %vm1214
    %v1216 = vsel %vm1215, %v1207, %v1212
    %v1217 = vmul.f32 %v1183, %v1206
    %v1218 = vmul.f32 %v1184, %v1216
    %v1220 = vperm.slane %v1172, 0
    %v1222 = vmul.f32 %v1217, %v1220
    %v1223 = vmul.f32 %v1218, %v1220
    %v1225 = vperm.slane %v1174, 0
    %v1227 = vadd.f32 %v1222, %v1225
    %v1228 = vadd.f32 %v1223, %v1225
    %v1230 = vsel %vm305, %v100, 0
    %1232 = vmatpush.msra.mxu0 0.0
    %1233 = vmatpush.msra.mxu0 0.0
    %1234 = vmatpush.msra.mxu0 0.0
    %1235 = vmatpush.msra.mxu0 0.0
    %1236 = vmatpush.msra.mxu0 0.0
    %1237 = vmatpush.msra.mxu0 0.0
    %1238 = vmatpush.msra.mxu0 0.0
    %1239 = vmatpush.msra.mxu0 0.0
    %1240 = vmatpush.msra.mxu0 0.0
    %1241 = vmatpush.msra.mxu0 0.0
    %1242 = vmatpush.msra.mxu0 0.0
    %1243 = vmatpush.msra.mxu0 0.0
    %1244 = vmatpush.msra.mxu0 0.0
    %1245 = vmatpush.msra.mxu0 0.0
    %1246 = vmatpush.msra.mxu0 %v1228
    %1247 = vmatpush.msra.mxu0 %v1227
    %1248 = vmatmul.f32.gmra.mxu0 %v1230
    %v1249 = vpop.f32.mrf.mxu0
    %v1250 = vadd.f32 0.0, %v1249
    %1251 = vdwg.mxu0
    %v1252 = vld [vmem:[%s21] sm:$0xff]
    %v1253 = vld [vmem:[%s21 + $0x8] sm:$0xff]
    %v1254 = vld [vmem:[%s21 + $0x10] sm:$0xff]
    %v1255 = vld [vmem:[%s21 + $0x18] sm:$0xff]
    %v1256 = vld [vmem:[%s22] sm:$0x1]
    %v1258 = vperm.slane %v1256, 0
    %v1261 = vsel %vm105, %v1250, 0
    %1263 = vmatpush.msra.mxu0 0.0
    %1264 = vmatpush.msra.mxu0 0.0
    %1265 = vmatpush.msra.mxu0 0.0
    %1266 = vmatpush.msra.mxu0 0.0
    %1267 = vmatpush.msra.mxu0 0.0
    %1268 = vmatpush.msra.mxu0 0.0
    %1269 = vmatpush.msra.mxu0 0.0
    %1270 = vmatpush.msra.mxu0 0.0
    %1271 = vmatpush.msra.mxu0 0.0
    %1272 = vmatpush.msra.mxu0 0.0
    %1273 = vmatpush.msra.mxu0 0.0
    %1274 = vmatpush.msra.mxu0 0.0
    %1275 = vmatpush.msra.mxu0 %v1255
    %1276 = vmatpush.msra.mxu0 %v1254
    %1277 = vmatpush.msra.mxu0 %v1253
    %1278 = vmatpush.msra.mxu0 %v1252
    %1279 = vmatmul.f32.gmra.mxu0 %v1261
    %v1280 = vpop.f32.mrf.mxu0
    %v1281 = vadd.f32 %v1258, %v1280
    %1282 = vdwg.mxu0
    %v1283 = vtanh.pop %v1281
    %v1284 = vld [vmem:[%s23] sm:$0xff]
    %v1285 = vld [vmem:[%s23 + $0x8] sm:$0xff]
    %v1286 = vld [vmem:[%s23 + $0x10] sm:$0xff]
    %v1287 = vld [vmem:[%s23 + $0x18] sm:$0xff]
    %v1288 = vld [vmem:[%s24] sm:$0x1]
    %v1290 = vperm.slane %v1288, 0
    %v1293 = vsel %vm105, %v1283, 0
    %1295 = vmatpush.msra.mxu0 0.0
    %1296 = vmatpush.msra.mxu0 0.0
    %1297 = vmatpush.msra.mxu0 0.0
    %1298 = vmatpush.msra.mxu0 0.0
    %1299 = vmatpush.msra.mxu0 0.0
    %1300 = vmatpush.msra.mxu0 0.0
    %1301 = vmatpush.msra.mxu0 0.0
    %1302 = vmatpush.msra.mxu0 0.0
    %1303 = vmatpush.msra.mxu0 0.0
    %1304 = vmatpush.msra.mxu0 0.0
    %1305 = vmatpush.msra.mxu0 0.0
    %1306 = vmatpush.msra.mxu0 0.0
    %1307 = vmatpush.msra.mxu0 %v1287
    %1308 = vmatpush.msra.mxu0 %v1286
    %1309 = vmatpush.msra.mxu0 %v1285
    %1310 = vmatpush.msra.mxu0 %v1284
    %1311 = vmatmul.f32.gmra.mxu0 %v1293
    %v1312 = vpop.f32.mrf.mxu0
    %v1313 = vadd.f32 %v1290, %v1312
    %1314 = vdwg.mxu0
    %v1315 = vld [vmem:[%s2] sm:$0x3]
    %1316 = vset.pattern.permute.xlu0 0
    %1317 = vperm.xlu0 %1316, %v1315
    %v1318 = vpop.permute.xlu0 %1317
    %vm1319 = vcmp.eq.s32.totalorder %v84, %v1318
    %v1320 = vsel %vm1319, 1, 0
    %v1321 = vcvt.s32.f32 %v1320
    %vm1322 = vcmask 9216
    %v1323 = vsel %vm1322, %v1313, -inf
    %1324 = vmax.xlane.f32.xlu0 %v1323
    %v1325 = vpop.xlane.xlu0 %1324
    %v1326 = vsub.f32 %v1313, %v1325
    %v1327 = vmul.f32 %v1326, 1.442695
    %v1328 = vpow.pop %v1327
    %v1329 = vsel %vm1322, %v1328, 0.0
    %1330 = vadd.xlane.f32.xlu0 %v1329
    %v1331 = vpop.xlane.xlu0 %1330
    %v1332 = vlog2.pop %v1331
    %v1333 = vmul.f32 %v1332, 0.6931472
    %v1334 = vadd.f32 %v1333, %v1325
    %v1335 = vmul.f32 %v1313, %v1321
    %v1336 = vsel %vm1322, %v1335, 0.0
    %1337 = vadd.xlane.f32.xlu0 %v1336
    %v1338 = vpop.xlane.xlu0 %1337
    %v1339 = vsub.f32 %v1334, %v1338
    %vm1340 = vcmask 1024
    %v1341 = vsel %vm1340, %v1339, 0.0
    %1342 = vadd.xlane.f32.xlu0 %v1341
    %v1343 = vpop.xlane.xlu0 %1342
    %v1344 = vrot.slane %v1343, 4
    %v1345 = vadd.f32 %v1343, %v1344
    %v1346 = vrot.slane %v1345, 2
    %v1347 = vadd.f32 %v1345, %v1346
    %v1348 = vrot.slane %v1347, 1
    %v1349 = vadd.f32 %v1347, %v1348
    %s1350 = vtos %v1349
    %v1351 = vstv %s1350
    %v1352 = vmul.f32 %v1351, 0.5
    %vm1353 = vcmask 0
    %1354 = vst.msk [vmem:[#allocation2] sm:$0x1] %vm1353, %v1352
    // Predicated region
    $region102: #{wrapper_model_forward.1} parent=1 // pred_check
      _
    $region103: #{wrapper_model_forward.1} parent=1 // pred_check_branch
      %1356 = sbr.rel (0) target = $region105
    $region104: #{wrapper_model_forward.1} parent=1 // pred_region
      %1358 = vsyncadd [#allocation3], 0
      %s1360 = sshll.u32 [#allocation2], 4
      %s1361 = int_to_ptr.vmem [resolvable:$true] %s1360
      %s1362 = sshll.u32 %s25, 4
      %s1363 = int_to_ptr.hbm [resolvable:$true] %s1362
      %1365 = dma.vmem_to_hbm [thread:$0]  %s1361, 16, %s1363, [#allocation3]
    $region105: #{wrapper_model_forward.1} parent=1 // pred_fallthru
      _
    // Predicated region
    $region106: #{wrapper_model_forward.1} parent=1 // pred_check
      _
    $region107: #{wrapper_model_forward.1} parent=1 // pred_check_branch
      %1367 = sbr.rel (0) target = $region109
    $region108: #{wrapper_model_forward.1} parent=1 // pred_region
      %1369 = dma.done [#allocation3], 16
    $region109: #{wrapper_model_forward.1} parent=1 // pred_fallthru
      _
    %1370 = vsyncpa [#allocation3], 1

</llo_original>
